<compile_context>
chip_gen: v6e
topology: v6e:2x2x1
jax: 0.10.0
libtpu: 0.0.40
codegen_flags: <defaults>
</compile_context>

<pallas_src>
import functools

import jax
import jax.numpy as jnp
from jax import lax
from jax.experimental import pallas as pl
from jax.experimental.pallas import tpu as pltpu


# ---------------------------------------------------------------------------
# Gate-major interleaved layout helper (wrapper-side, runs in XLA once).
# (X, 4H) with PyTorch gate order [i|f|g|o]  ->  (X, 8H) laid out as
# [i_a, i_b, f_a, f_b, g_a, g_b, o_a, o_b]; this matrix's gates go at parity
# `slot` (0 or 1), zeros at the other parity.
# ---------------------------------------------------------------------------
def _interleave(m4, slot, H):
    X = m4.shape[0]
    zeros = jnp.zeros((X, H), m4.dtype)
    cols = []
    for gi in range(4):
        blk = m4[:, gi * H:(gi + 1) * H]
        cols.extend([blk, zeros] if slot == 0 else [zeros, blk])
    return jnp.concatenate(cols, axis=1)


# ---------------------------------------------------------------------------
# Fused kernel: embedding -> 2 char LSTMs -> word bi-LSTM -> Linear
# ---------------------------------------------------------------------------
def _tagger_kernel(N, T, H, Vp, Kp, ids_ref, wslab_ref, bslab_ref, out_ref, gx_scr):
    NT = N * T
    V2 = 2 * Vp
    H2, H4, H6, H8 = 2 * H, 4 * H, 6 * H, 8 * H

    # ---- static offsets into the packed bf16 weight slab ----------------------
    r = 0
    emb_tbl = wslab_ref[r:r + V2, 0:H8]; r += V2      # (2Vp, 8H) [pref tbl ; suff tbl]
    whh_c   = wslab_ref[r:r + H2, 0:H8]; r += H2      # (2H, 8H) char block-diag W_hh
    wzf     = wslab_ref[r:r + H2, 0:H8]; r += H2      # (2H, 8H) word fwd input proj
    wzb     = wslab_ref[r:r + H2, 0:H8]; r += H2      # (2H, 8H) word bwd input proj
    whh_w   = wslab_ref[r:r + H2, 0:H8]; r += H2      # (2H, 8H) word block-diag W_hh
    wfc     = wslab_ref[r:r + H2, 0:Kp]; r += H2      # (2H, Kp) final Linear

    b_char = bslab_ref[0:1, 0:H8]                     # f32 biases (kept f32)
    b_zf   = bslab_ref[1:2, 0:H8]
    b_zb   = bslab_ref[2:3, 0:H8]
    b_fc   = bslab_ref[3:4, 0:Kp]

    # ---- 1+2: embedding gather (two-hot matmul) fused with the char-LSTM input
    #      projection for every timestep of BOTH char LSTMs: ONE matmul. --------
    # TODO(synk): out-of-range char ids silently produce zero gates (PyTorch
    #             would raise); add pl.debug_check under enable_debug_checks if needed.
    ids = ids_ref[...]                                          # (NT, 2) int32
    lane = lax.broadcasted_iota(jnp.int32, (NT, V2), 1)
    twohot = jnp.where((lane == ids[:, 0:1]) | (lane == ids[:, 1:2]),
                       1.0, 0.0).astype(jnp.bfloat16)
    gx_scr[...] = (jnp.dot(twohot, emb_tbl, preferred_element_type=jnp.float32)
                   + b_char)                                    # (NT, 8H)

    def gate_math(gates, c_prev):
        # full-width sigmoid / tanh (2 EUP evaluations), then static lane slices
        sg = jax.nn.sigmoid(gates)
        th = jnp.tanh(gates)
        i = sg[:, 0:H2]
        f = sg[:, H2:H4]
        g = th[:, H4:H6]
        o = sg[:, H6:H8]
        c_new = f * c_prev + i * g
        return o * jnp.tanh(c_new), c_new

    # ---- 3: both char LSTMs in one block-diagonal recurrence ------------------
    h = jnp.zeros((N, H2), jnp.float32)        # [h_pref | h_suff]
    c = jnp.zeros((N, H2), jnp.float32)
    for t in range(T):                         # T small & static -> unrolled
        gh = jnp.dot(h.astype(jnp.bfloat16), whh_c,
                     preferred_element_type=jnp.float32)        # (N, 8H)
        gates = gx_scr[t * N:(t + 1) * N, :] + gh
        h, c = gate_math(gates, c)
    z = h                                      # == concat(pref_last, suff_last), (N, 2H)

    # ---- 4+5: word-level bi-LSTM (dropout = identity in eval) -----------------
    z16 = z.astype(jnp.bfloat16)
    gzf = jnp.dot(z16, wzf, preferred_element_type=jnp.float32) + b_zf   # (N, 8H)
    gzb = jnp.dot(z16, wzb, preferred_element_type=jnp.float32) + b_zb   # (N, 8H)

    hw = jnp.zeros((1, H2), jnp.float32)       # [h_fwd | h_bwd]
    cw = jnp.zeros((1, H2), jnp.float32)
    hf_list, hb_list = [], []
    for s in range(N):                         # fwd step s, bwd step N-1-s, interleaved
        tb = N - 1 - s
        gh = jnp.dot(hw.astype(jnp.bfloat16), whh_w,
                     preferred_element_type=jnp.float32)        # (1, 8H)
        gates = gzf[s:s + 1, :] + gzb[tb:tb + 1, :] + gh
        hw, cw = gate_math(gates, cw)
        hf_list.append(hw[:, 0:H])             # fwd output for position s
        hb_list.append(hw[:, H:H2])            # bwd output for position tb

    hf_all = jnp.concatenate(hf_list, axis=0)                   # (N, H), by position
    hb_all = jnp.concatenate(hb_list[::-1], axis=0)             # (N, H), by position
    hcat = jnp.concatenate([hf_all, hb_all], axis=1)            # (N, 2H)

    # ---- 6: final Linear, lane-dense output (Kp lanes) ------------------------
    out_ref[...] = (jnp.dot(hcat.astype(jnp.bfloat16), wfc,
                            preferred_element_type=jnp.float32) + b_fc)


# ---------------------------------------------------------------------------
# Parameter construction (deterministic, synthetic) and forward wrapper
# ---------------------------------------------------------------------------
def init_lstm_params(key, in_size, hidden):
    k1, k2, k3, k4 = jax.random.split(key, 4)
    s = 1.0 / jnp.sqrt(jnp.float32(hidden))
    w_ih = jax.random.uniform(k1, (4 * hidden, in_size), jnp.float32, -s, s)
    w_hh = jax.random.uniform(k2, (4 * hidden, hidden), jnp.float32, -s, s)
    b_ih = jax.random.uniform(k3, (4 * hidden,), jnp.float32, -s, s)
    b_hh = jax.random.uniform(k4, (4 * hidden,), jnp.float32, -s, s)
    # pre-transpose for row-major x @ W; PyTorch adds b_ih + b_hh
    return (w_ih.T, w_hh.T, (b_ih + b_hh)[None, :])


def init_params(key, numChars, numTags, embSize, rnnSize):
    ks = jax.random.split(key, 7)
    emb = jax.random.normal(ks[0], (numChars + 1, embSize), jnp.float32)
    fwd_char = init_lstm_params(ks[1], embSize, rnnSize)
    bwd_char = init_lstm_params(ks[2], embSize, rnnSize)
    bi_fwd = init_lstm_params(ks[3], 2 * rnnSize, rnnSize)
    bi_bwd = init_lstm_params(ks[4], 2 * rnnSize, rnnSize)
    s = 1.0 / jnp.sqrt(jnp.float32(2 * rnnSize))
    w_fc = jax.random.uniform(ks[5], (numTags + 1, 2 * rnnSize), jnp.float32, -s, s)
    b_fc = jax.random.uniform(ks[6], (numTags + 1,), jnp.float32, -s, s)
    fc = (w_fc.T, b_fc[None, :])
    return dict(embedding=emb, forward_lstm=fwd_char, backward_lstm=bwd_char,
                bilstm_f=bi_fwd, bilstm_b=bi_bwd, fc=fc)


@jax.jit
def tagger_forward(params, pref_mat, suff_mat):
    # TODO(synk): dropout is a no-op in eval mode and the original module does no
    # per-word char-length masking; both behaviors are preserved as-is.
    N, T = pref_mat.shape
    emb = params["embedding"]                       # (V, E) f32
    V = emb.shape[0]
    wih_p, whh_p, b_p = params["forward_lstm"]      # (E,4H), (H,4H), (1,4H)
    wih_s, whh_s, b_s = params["backward_lstm"]
    wih_f, whh_f, b_f = params["bilstm_f"]          # (2H,4H), (H,4H), (1,4H)
    wih_b, whh_b, b_b = params["bilstm_b"]
    w_fc, b_fc = params["fc"]                       # (2H,K), (1,K)
    H = whh_p.shape[0]
    K = w_fc.shape[1]

    H8 = 8 * H
    Vp = ((V + 7) // 8) * 8                          # pad vocab rows to sublane multiple
    Kp = max(128, ((K + 127) // 128) * 128)          # lane-dense output
    W = max(H8, Kp)                                  # common lane width of the slabs

    def padw(m):                                     # pad lanes to slab width
        return jnp.pad(m, ((0, 0), (0, W - m.shape[1])))

    # --- embedding folded with char-LSTM input projection (gate-interleaved) ---
    #     onehot(id) @ (emb @ W_ih)  ==  emb[id] @ W_ih ; bias kept f32, added in-kernel.
    ewp8 = jnp.pad(_interleave(emb @ wih_p, 0, H), ((0, Vp - V), (0, 0)))   # (Vp, 8H)
    ews8 = jnp.pad(_interleave(emb @ wih_s, 1, H), ((0, Vp - V), (0, 0)))
    emb_tbl = jnp.concatenate([ewp8, ews8], axis=0)                          # (2Vp, 8H)

    # --- block-diagonal recurrent weights (gate-major interleaved columns) -----
    whh_c = jnp.concatenate([_interleave(whh_p, 0, H),
                             _interleave(whh_s, 1, H)], axis=0)              # (2H, 8H)
    wzf = _interleave(wih_f, 0, H)                                           # (2H, 8H)
    wzb = _interleave(wih_b, 1, H)
    whh_w = jnp.concatenate([_interleave(whh_f, 0, H),
                             _interleave(whh_b, 1, H)], axis=0)              # (2H, 8H)
    wfc_pad = jnp.pad(w_fc, ((0, 0), (0, Kp - K)))                           # (2H, Kp)

    # --- pack all weights into one bf16 slab (one HBM->VMEM DMA) ---------------
    wslab = jnp.concatenate([padw(emb_tbl), padw(whh_c), padw(wzf), padw(wzb),
                             padw(whh_w), padw(wfc_pad)],
                            axis=0).astype(jnp.bfloat16)

    # --- f32 bias slab ----------------------------------------------------------
    b_char = _interleave(b_p, 0, H) + _interleave(b_s, 1, H)                 # (1, 8H)
    bslab = jnp.concatenate([padw(b_char),
                             padw(_interleave(b_f, 0, H)),
                             padw(_interleave(b_b, 1, H)),
                             padw(jnp.pad(b_fc, ((0, 0), (0, Kp - K))))],
                            axis=0).astype(jnp.float32)                      # (4, W)

    # --- ids, time-major, suff offset into the stacked table -------------------
    pref_tm = jnp.transpose(pref_mat.astype(jnp.int32)).reshape(T * N, 1)
    suff_tm = jnp.transpose(suff_mat.astype(jnp.int32)).reshape(T * N, 1) + Vp
    ids = jnp.concatenate([pref_tm, suff_tm], axis=1)                        # (NT, 2)

    kernel = functools.partial(_tagger_kernel, N, T, H, Vp, Kp)
    out_pad = pl.pallas_call(
        kernel,
        out_shape=jax.ShapeDtypeStruct((N, Kp), jnp.float32),
        in_specs=[pl.BlockSpec(memory_space=pltpu.MemorySpace.VMEM)] * 3,
        out_specs=pl.BlockSpec(memory_space=pltpu.MemorySpace.VMEM),
        scratch_shapes=[pltpu.VMEM((N * T, H8), jnp.float32)],   # hoisted char x-gates
    )(ids, wslab, bslab)
    return out_pad[:, :K]


if __name__ == "__main__":
    numChars, numTags = 20, 5
    embSize, rnnSize = 16, 32
    N, T = 8, 10                       # numWords, maxCharLen

    key = jax.random.PRNGKey(0)
    k_params, k_pref, k_suff = jax.random.split(key, 3)

    params = init_params(k_params, numChars, numTags, embSize, rnnSize)
    pref_mat = jax.random.randint(k_pref, (N, T), 0, numChars + 1, dtype=jnp.int32)
    suff_mat = jax.random.randint(k_suff, (N, T), 0, numChars + 1, dtype=jnp.int32)

    out = tagger_forward(params, pref_mat, suff_mat)
    out = jax.block_until_ready(out)
    assert out.shape == (N, numTags + 1), out.shape
    assert out.dtype == jnp.float32
    print("KERNEL_OK")
</pallas_src>

<mosaic_0001>
module attributes {stable_mosaic.version = 11 : i64} {
  func.func @_tagger_kernel(%arg0: memref<80x2xi32, #tpu.memory_space<vmem>>, %arg1: memref<368x256xbf16, #tpu.memory_space<vmem>>, %arg2: memref<4x256xf32, #tpu.memory_space<vmem>>, %arg3: memref<8x128xf32, #tpu.memory_space<vmem>>, %arg4: memref<80x256xf32, #tpu.memory_space<vmem>>) attributes {dimension_semantics = [], scalar_prefetch = 0 : i64, scratch_operands = 1 : i64, tpu.core_type = #tpu.core_type<tc>} {
    %c0 = arith.constant 0 : index
    %c0_0 = arith.constant 0 : index
    %0 = vector.load %arg1[%c0, %c0_0] : memref<368x256xbf16, #tpu.memory_space<vmem>>, vector<48x256xbf16>
    %c48 = arith.constant 48 : index
    %c0_1 = arith.constant 0 : index
    %1 = vector.load %arg1[%c48, %c0_1] : memref<368x256xbf16, #tpu.memory_space<vmem>>, vector<64x256xbf16>
    %c112 = arith.constant 112 : index
    %c0_2 = arith.constant 0 : index
    %2 = vector.load %arg1[%c112, %c0_2] : memref<368x256xbf16, #tpu.memory_space<vmem>>, vector<64x256xbf16>
    %c176 = arith.constant 176 : index
    %c0_3 = arith.constant 0 : index
    %3 = vector.load %arg1[%c176, %c0_3] : memref<368x256xbf16, #tpu.memory_space<vmem>>, vector<64x256xbf16>
    %c240 = arith.constant 240 : index
    %c0_4 = arith.constant 0 : index
    %4 = vector.load %arg1[%c240, %c0_4] : memref<368x256xbf16, #tpu.memory_space<vmem>>, vector<64x256xbf16>
    %c304 = arith.constant 304 : index
    %c0_5 = arith.constant 0 : index
    %5 = vector.load %arg1[%c304, %c0_5] : memref<368x256xbf16, #tpu.memory_space<vmem>>, vector<64x128xbf16>
    %c0_6 = arith.constant 0 : index
    %c0_7 = arith.constant 0 : index
    %6 = vector.load %arg2[%c0_6, %c0_7] : memref<4x256xf32, #tpu.memory_space<vmem>>, vector<1x256xf32>
    %c1 = arith.constant 1 : index
    %c0_8 = arith.constant 0 : index
    %7 = vector.load %arg2[%c1, %c0_8] : memref<4x256xf32, #tpu.memory_space<vmem>>, vector<1x256xf32>
    %c2 = arith.constant 2 : index
    %c0_9 = arith.constant 0 : index
    %8 = vector.load %arg2[%c2, %c0_9] : memref<4x256xf32, #tpu.memory_space<vmem>>, vector<1x256xf32>
    %c3 = arith.constant 3 : index
    %c0_10 = arith.constant 0 : index
    %9 = vector.load %arg2[%c3, %c0_10] : memref<4x256xf32, #tpu.memory_space<vmem>>, vector<1x128xf32>
    %c0_11 = arith.constant 0 : index
    %c0_12 = arith.constant 0 : index
    %10 = vector.load %arg0[%c0_11, %c0_12] : memref<80x2xi32, #tpu.memory_space<vmem>>, vector<80x2xi32>
    %11 = tpu.iota {dimensions = array<i32: 1>} : vector<80x48xi32>
    %12 = vector.extract_strided_slice %10 {offsets = [0, 0], sizes = [80, 1], strides = [1, 1]} : vector<80x2xi32> to vector<80x1xi32>
    %13 = vector.broadcast %12 : vector<80x1xi32> to vector<80x48xi32>
    %14 = arith.cmpi eq, %11, %13 : vector<80x48xi32>
    %15 = vector.extract_strided_slice %10 {offsets = [0, 1], sizes = [80, 1], strides = [1, 1]} : vector<80x2xi32> to vector<80x1xi32>
    %16 = vector.broadcast %15 : vector<80x1xi32> to vector<80x48xi32>
    %17 = arith.cmpi eq, %11, %16 : vector<80x48xi32>
    %18 = arith.ori %14, %17 : vector<80x48xi1>
    %cst = arith.constant 1.000000e+00 : f32
    %cst_13 = arith.constant 0.000000e+00 : f32
    %19 = vector.broadcast %cst : f32 to vector<80x48xf32>
    %20 = vector.broadcast %cst_13 : f32 to vector<80x48xf32>
    %21 = arith.select %18, %19, %20 : vector<80x48xi1>, vector<80x48xf32>
    %22 = arith.truncf %21 : vector<80x48xf32> to vector<80x48xbf16>
    %cst_14 = arith.constant dense<0.000000e+00> : vector<80x256xf32>
    %23 = tpu.matmul %22, %0, %cst_14 {dimension_numbers = #tpu.dot_dimension_numbers<[1], [0], [0], [1], [0, 0, 1, 1], [], []>} : vector<80x48xbf16>, vector<48x256xbf16>, vector<80x256xf32> -> vector<80x256xf32>
    %24 = vector.broadcast %6 : vector<1x256xf32> to vector<80x256xf32>
    %25 = arith.addf %23, %24 : vector<80x256xf32>
    %c0_15 = arith.constant 0 : index
    %c0_16 = arith.constant 0 : index
    %26 = vector.load %arg4[%c0_15, %c0_16] : memref<80x256xf32, #tpu.memory_space<vmem>>, vector<80x256xf32>
    tpu.vector_store %arg4[%c0_15, %c0_16], %25 {strides = array<i32>} : memref<80x256xf32, #tpu.memory_space<vmem>>, vector<80x256xf32>,
    %cst_17 = arith.constant 0.000000e+00 : f32
    %27 = vector.broadcast %cst_17 : f32 to vector<8x64xf32>
    %cst_18 = arith.constant 0.000000e+00 : f32
    %28 = vector.broadcast %cst_18 : f32 to vector<8x64xf32>
    %29 = arith.truncf %27 : vector<8x64xf32> to vector<8x64xbf16>
    %cst_19 = arith.constant dense<0.000000e+00> : vector<8x256xf32>
    %30 = tpu.matmul %29, %1, %cst_19 {dimension_numbers = #tpu.dot_dimension_numbers<[1], [0], [0], [1], [0, 0, 1, 1], [], []>} : vector<8x64xbf16>, vector<64x256xbf16>, vector<8x256xf32> -> vector<8x256xf32>
    %c0_20 = arith.constant 0 : index
    %c0_21 = arith.constant 0 : index
    %31 = vector.load %arg4[%c0_20, %c0_21] : memref<80x256xf32, #tpu.memory_space<vmem>>, vector<8x256xf32>
    %32 = arith.addf %31, %30 : vector<8x256xf32>
    %33 = arith.negf %32 : vector<8x256xf32>
    %34 = math.exp %33 : vector<8x256xf32>
    %cst_22 = arith.constant 1.000000e+00 : f32
    %35 = vector.broadcast %cst_22 : f32 to vector<8x256xf32>
    %36 = arith.addf %35, %34 : vector<8x256xf32>
    %37 = arith.divf %35, %36 : vector<8x256xf32>
    %38 = math.tanh %32 : vector<8x256xf32>
    %39 = vector.extract_strided_slice %37 {offsets = [0, 0], sizes = [8, 64], strides = [1, 1]} : vector<8x256xf32> to vector<8x64xf32>
    %40 = vector.extract_strided_slice %37 {offsets = [0, 64], sizes = [8, 64], strides = [1, 1]} : vector<8x256xf32> to vector<8x64xf32>
    %41 = vector.extract_strided_slice %38 {offsets = [0, 128], sizes = [8, 64], strides = [1, 1]} : vector<8x256xf32> to vector<8x64xf32>
    %42 = vector.extract_strided_slice %37 {offsets = [0, 192], sizes = [8, 64], strides = [1, 1]} : vector<8x256xf32> to vector<8x64xf32>
    %43 = arith.mulf %40, %28 : vector<8x64xf32>
    %44 = arith.mulf %39, %41 : vector<8x64xf32>
    %45 = arith.addf %43, %44 : vector<8x64xf32>
    %46 = math.tanh %45 : vector<8x64xf32>
    %47 = arith.mulf %42, %46 : vector<8x64xf32>
    %48 = arith.truncf %47 : vector<8x64xf32> to vector<8x64xbf16>
    %cst_23 = arith.constant dense<0.000000e+00> : vector<8x256xf32>
    %49 = tpu.matmul %48, %1, %cst_23 {dimension_numbers = #tpu.dot_dimension_numbers<[1], [0], [0], [1], [0, 0, 1, 1], [], []>} : vector<8x64xbf16>, vector<64x256xbf16>, vector<8x256xf32> -> vector<8x256xf32>
    %c8 = arith.constant 8 : index
    %c0_24 = arith.constant 0 : index
    %50 = vector.load %arg4[%c8, %c0_24] : memref<80x256xf32, #tpu.memory_space<vmem>>, vector<8x256xf32>
    %51 = arith.addf %50, %49 : vector<8x256xf32>
    %52 = arith.negf %51 : vector<8x256xf32>
    %53 = math.exp %52 : vector<8x256xf32>
    %cst_25 = arith.constant 1.000000e+00 : f32
    %54 = vector.broadcast %cst_25 : f32 to vector<8x256xf32>
    %55 = arith.addf %54, %53 : vector<8x256xf32>
    %56 = arith.divf %54, %55 : vector<8x256xf32>
    %57 = math.tanh %51 : vector<8x256xf32>
    %58 = vector.extract_strided_slice %56 {offsets = [0, 0], sizes = [8, 64], strides = [1, 1]} : vector<8x256xf32> to vector<8x64xf32>
    %59 = vector.extract_strided_slice %56 {offsets = [0, 64], sizes = [8, 64], strides = [1, 1]} : vector<8x256xf32> to vector<8x64xf32>
    %60 = vector.extract_strided_slice %57 {offsets = [0, 128], sizes = [8, 64], strides = [1, 1]} : vector<8x256xf32> to vector<8x64xf32>
    %61 = vector.extract_strided_slice %56 {offsets = [0, 192], sizes = [8, 64], strides = [1, 1]} : vector<8x256xf32> to vector<8x64xf32>
    %62 = arith.mulf %59, %45 : vector<8x64xf32>
    %63 = arith.mulf %58, %60 : vector<8x64xf32>
    %64 = arith.addf %62, %63 : vector<8x64xf32>
    %65 = math.tanh %64 : vector<8x64xf32>
    %66 = arith.mulf %61, %65 : vector<8x64xf32>
    %67 = arith.truncf %66 : vector<8x64xf32> to vector<8x64xbf16>
    %cst_26 = arith.constant dense<0.000000e+00> : vector<8x256xf32>
    %68 = tpu.matmul %67, %1, %cst_26 {dimension_numbers = #tpu.dot_dimension_numbers<[1], [0], [0], [1], [0, 0, 1, 1], [], []>} : vector<8x64xbf16>, vector<64x256xbf16>, vector<8x256xf32> -> vector<8x256xf32>
    %c16 = arith.constant 16 : index
    %c0_27 = arith.constant 0 : index
    %69 = vector.load %arg4[%c16, %c0_27] : memref<80x256xf32, #tpu.memory_space<vmem>>, vector<8x256xf32>
    %70 = arith.addf %69, %68 : vector<8x256xf32>
    %71 = arith.negf %70 : vector<8x256xf32>
    %72 = math.exp %71 : vector<8x256xf32>
    %cst_28 = arith.constant 1.000000e+00 : f32
    %73 = vector.broadcast %cst_28 : f32 to vector<8x256xf32>
    %74 = arith.addf %73, %72 : vector<8x256xf32>
    %75 = arith.divf %73, %74 : vector<8x256xf32>
    %76 = math.tanh %70 : vector<8x256xf32>
    %77 = vector.extract_strided_slice %75 {offsets = [0, 0], sizes = [8, 64], strides = [1, 1]} : vector<8x256xf32> to vector<8x64xf32>
    %78 = vector.extract_strided_slice %75 {offsets = [0, 64], sizes = [8, 64], strides = [1, 1]} : vector<8x256xf32> to vector<8x64xf32>
    %79 = vector.extract_strided_slice %76 {offsets = [0, 128], sizes = [8, 64], strides = [1, 1]} : vector<8x256xf32> to vector<8x64xf32>
    %80 = vector.extract_strided_slice %75 {offsets = [0, 192], sizes = [8, 64], strides = [1, 1]} : vector<8x256xf32> to vector<8x64xf32>
    %81 = arith.mulf %78, %64 : vector<8x64xf32>
    %82 = arith.mulf %77, %79 : vector<8x64xf32>
    %83 = arith.addf %81, %82 : vector<8x64xf32>
    %84 = math.tanh %83 : vector<8x64xf32>
    %85 = arith.mulf %80, %84 : vector<8x64xf32>
    %86 = arith.truncf %85 : vector<8x64xf32> to vector<8x64xbf16>
    %cst_29 = arith.constant dense<0.000000e+00> : vector<8x256xf32>
    %87 = tpu.matmul %86, %1, %cst_29 {dimension_numbers = #tpu.dot_dimension_numbers<[1], [0], [0], [1], [0, 0, 1, 1], [], []>} : vector<8x64xbf16>, vector<64x256xbf16>, vector<8x256xf32> -> vector<8x256xf32>
    %c24 = arith.constant 24 : index
    %c0_30 = arith.constant 0 : index
    %88 = vector.load %arg4[%c24, %c0_30] : memref<80x256xf32, #tpu.memory_space<vmem>>, vector<8x256xf32>
    %89 = arith.addf %88, %87 : vector<8x256xf32>
    %90 = arith.negf %89 : vector<8x256xf32>
    %91 = math.exp %90 : vector<8x256xf32>
    %cst_31 = arith.constant 1.000000e+00 : f32
    %92 = vector.broadcast %cst_31 : f32 to vector<8x256xf32>
    %93 = arith.addf %92, %91 : vector<8x256xf32>
    %94 = arith.divf %92, %93 : vector<8x256xf32>
    %95 = math.tanh %89 : vector<8x256xf32>
    %96 = vector.extract_strided_slice %94 {offsets = [0, 0], sizes = [8, 64], strides = [1, 1]} : vector<8x256xf32> to vector<8x64xf32>
    %97 = vector.extract_strided_slice %94 {offsets = [0, 64], sizes = [8, 64], strides = [1, 1]} : vector<8x256xf32> to vector<8x64xf32>
    %98 = vector.extract_strided_slice %95 {offsets = [0, 128], sizes = [8, 64], strides = [1, 1]} : vector<8x256xf32> to vector<8x64xf32>
    %99 = vector.extract_strided_slice %94 {offsets = [0, 192], sizes = [8, 64], strides = [1, 1]} : vector<8x256xf32> to vector<8x64xf32>
    %100 = arith.mulf %97, %83 : vector<8x64xf32>
    %101 = arith.mulf %96, %98 : vector<8x64xf32>
    %102 = arith.addf %100, %101 : vector<8x64xf32>
    %103 = math.tanh %102 : vector<8x64xf32>
    %104 = arith.mulf %99, %103 : vector<8x64xf32>
    %105 = arith.truncf %104 : vector<8x64xf32> to vector<8x64xbf16>
    %cst_32 = arith.constant dense<0.000000e+00> : vector<8x256xf32>
    %106 = tpu.matmul %105, %1, %cst_32 {dimension_numbers = #tpu.dot_dimension_numbers<[1], [0], [0], [1], [0, 0, 1, 1], [], []>} : vector<8x64xbf16>, vector<64x256xbf16>, vector<8x256xf32> -> vector<8x256xf32>
    %c32 = arith.constant 32 : index
    %c0_33 = arith.constant 0 : index
    %107 = vector.load %arg4[%c32, %c0_33] : memref<80x256xf32, #tpu.memory_space<vmem>>, vector<8x256xf32>
    %108 = arith.addf %107, %106 : vector<8x256xf32>
    %109 = arith.negf %108 : vector<8x256xf32>
    %110 = math.exp %109 : vector<8x256xf32>
    %cst_34 = arith.constant 1.000000e+00 : f32
    %111 = vector.broadcast %cst_34 : f32 to vector<8x256xf32>
    %112 = arith.addf %111, %110 : vector<8x256xf32>
    %113 = arith.divf %111, %112 : vector<8x256xf32>
    %114 = math.tanh %108 : vector<8x256xf32>
    %115 = vector.extract_strided_slice %113 {offsets = [0, 0], sizes = [8, 64], strides = [1, 1]} : vector<8x256xf32> to vector<8x64xf32>
    %116 = vector.extract_strided_slice %113 {offsets = [0, 64], sizes = [8, 64], strides = [1, 1]} : vector<8x256xf32> to vector<8x64xf32>
    %117 = vector.extract_strided_slice %114 {offsets = [0, 128], sizes = [8, 64], strides = [1, 1]} : vector<8x256xf32> to vector<8x64xf32>
    %118 = vector.extract_strided_slice %113 {offsets = [0, 192], sizes = [8, 64], strides = [1, 1]} : vector<8x256xf32> to vector<8x64xf32>
    %119 = arith.mulf %116, %102 : vector<8x64xf32>
    %120 = arith.mulf %115, %117 : vector<8x64xf32>
    %121 = arith.addf %119, %120 : vector<8x64xf32>
    %122 = math.tanh %121 : vector<8x64xf32>
    %123 = arith.mulf %118, %122 : vector<8x64xf32>
    %124 = arith.truncf %123 : vector<8x64xf32> to vector<8x64xbf16>
    %cst_35 = arith.constant dense<0.000000e+00> : vector<8x256xf32>
    %125 = tpu.matmul %124, %1, %cst_35 {dimension_numbers = #tpu.dot_dimension_numbers<[1], [0], [0], [1], [0, 0, 1, 1], [], []>} : vector<8x64xbf16>, vector<64x256xbf16>, vector<8x256xf32> -> vector<8x256xf32>
    %c40 = arith.constant 40 : index
    %c0_36 = arith.constant 0 : index
    %126 = vector.load %arg4[%c40, %c0_36] : memref<80x256xf32, #tpu.memory_space<vmem>>, vector<8x256xf32>
    %127 = arith.addf %126, %125 : vector<8x256xf32>
    %128 = arith.negf %127 : vector<8x256xf32>
    %129 = math.exp %128 : vector<8x256xf32>
    %cst_37 = arith.constant 1.000000e+00 : f32
    %130 = vector.broadcast %cst_37 : f32 to vector<8x256xf32>
    %131 = arith.addf %130, %129 : vector<8x256xf32>
    %132 = arith.divf %130, %131 : vector<8x256xf32>
    %133 = math.tanh %127 : vector<8x256xf32>
    %134 = vector.extract_strided_slice %132 {offsets = [0, 0], sizes = [8, 64], strides = [1, 1]} : vector<8x256xf32> to vector<8x64xf32>
    %135 = vector.extract_strided_slice %132 {offsets = [0, 64], sizes = [8, 64], strides = [1, 1]} : vector<8x256xf32> to vector<8x64xf32>
    %136 = vector.extract_strided_slice %133 {offsets = [0, 128], sizes = [8, 64], strides = [1, 1]} : vector<8x256xf32> to vector<8x64xf32>
    %137 = vector.extract_strided_slice %132 {offsets = [0, 192], sizes = [8, 64], strides = [1, 1]} : vector<8x256xf32> to vector<8x64xf32>
    %138 = arith.mulf %135, %121 : vector<8x64xf32>
    %139 = arith.mulf %134, %136 : vector<8x64xf32>
    %140 = arith.addf %138, %139 : vector<8x64xf32>
    %141 = math.tanh %140 : vector<8x64xf32>
    %142 = arith.mulf %137, %141 : vector<8x64xf32>
    %143 = arith.truncf %142 : vector<8x64xf32> to vector<8x64xbf16>
    %cst_38 = arith.constant dense<0.000000e+00> : vector<8x256xf32>
    %144 = tpu.matmul %143, %1, %cst_38 {dimension_numbers = #tpu.dot_dimension_numbers<[1], [0], [0], [1], [0, 0, 1, 1], [], []>} : vector<8x64xbf16>, vector<64x256xbf16>, vector<8x256xf32> -> vector<8x256xf32>
    %c48_39 = arith.constant 48 : index
    %c0_40 = arith.constant 0 : index
    %145 = vector.load %arg4[%c48_39, %c0_40] : memref<80x256xf32, #tpu.memory_space<vmem>>, vector<8x256xf32>
    %146 = arith.addf %145, %144 : vector<8x256xf32>
    %147 = arith.negf %146 : vector<8x256xf32>
    %148 = math.exp %147 : vector<8x256xf32>
    %cst_41 = arith.constant 1.000000e+00 : f32
    %149 = vector.broadcast %cst_41 : f32 to vector<8x256xf32>
    %150 = arith.addf %149, %148 : vector<8x256xf32>
    %151 = arith.divf %149, %150 : vector<8x256xf32>
    %152 = math.tanh %146 : vector<8x256xf32>
    %153 = vector.extract_strided_slice %151 {offsets = [0, 0], sizes = [8, 64], strides = [1, 1]} : vector<8x256xf32> to vector<8x64xf32>
    %154 = vector.extract_strided_slice %151 {offsets = [0, 64], sizes = [8, 64], strides = [1, 1]} : vector<8x256xf32> to vector<8x64xf32>
    %155 = vector.extract_strided_slice %152 {offsets = [0, 128], sizes = [8, 64], strides = [1, 1]} : vector<8x256xf32> to vector<8x64xf32>
    %156 = vector.extract_strided_slice %151 {offsets = [0, 192], sizes = [8, 64], strides = [1, 1]} : vector<8x256xf32> to vector<8x64xf32>
    %157 = arith.mulf %154, %140 : vector<8x64xf32>
    %158 = arith.mulf %153, %155 : vector<8x64xf32>
    %159 = arith.addf %157, %158 : vector<8x64xf32>
    %160 = math.tanh %159 : vector<8x64xf32>
    %161 = arith.mulf %156, %160 : vector<8x64xf32>
    %162 = arith.truncf %161 : vector<8x64xf32> to vector<8x64xbf16>
    %cst_42 = arith.constant dense<0.000000e+00> : vector<8x256xf32>
    %163 = tpu.matmul %162, %1, %cst_42 {dimension_numbers = #tpu.dot_dimension_numbers<[1], [0], [0], [1], [0, 0, 1, 1], [], []>} : vector<8x64xbf16>, vector<64x256xbf16>, vector<8x256xf32> -> vector<8x256xf32>
    %c56 = arith.constant 56 : index
    %c0_43 = arith.constant 0 : index
    %164 = vector.load %arg4[%c56, %c0_43] : memref<80x256xf32, #tpu.memory_space<vmem>>, vector<8x256xf32>
    %165 = arith.addf %164, %163 : vector<8x256xf32>
    %166 = arith.negf %165 : vector<8x256xf32>
    %167 = math.exp %166 : vector<8x256xf32>
    %cst_44 = arith.constant 1.000000e+00 : f32
    %168 = vector.broadcast %cst_44 : f32 to vector<8x256xf32>
    %169 = arith.addf %168, %167 : vector<8x256xf32>
    %170 = arith.divf %168, %169 : vector<8x256xf32>
    %171 = math.tanh %165 : vector<8x256xf32>
    %172 = vector.extract_strided_slice %170 {offsets = [0, 0], sizes = [8, 64], strides = [1, 1]} : vector<8x256xf32> to vector<8x64xf32>
    %173 = vector.extract_strided_slice %170 {offsets = [0, 64], sizes = [8, 64], strides = [1, 1]} : vector<8x256xf32> to vector<8x64xf32>
    %174 = vector.extract_strided_slice %171 {offsets = [0, 128], sizes = [8, 64], strides = [1, 1]} : vector<8x256xf32> to vector<8x64xf32>
    %175 = vector.extract_strided_slice %170 {offsets = [0, 192], sizes = [8, 64], strides = [1, 1]} : vector<8x256xf32> to vector<8x64xf32>
    %176 = arith.mulf %173, %159 : vector<8x64xf32>
    %177 = arith.mulf %172, %174 : vector<8x64xf32>
    %178 = arith.addf %176, %177 : vector<8x64xf32>
    %179 = math.tanh %178 : vector<8x64xf32>
    %180 = arith.mulf %175, %179 : vector<8x64xf32>
    %181 = arith.truncf %180 : vector<8x64xf32> to vector<8x64xbf16>
    %cst_45 = arith.constant dense<0.000000e+00> : vector<8x256xf32>
    %182 = tpu.matmul %181, %1, %cst_45 {dimension_numbers = #tpu.dot_dimension_numbers<[1], [0], [0], [1], [0, 0, 1, 1], [], []>} : vector<8x64xbf16>, vector<64x256xbf16>, vector<8x256xf32> -> vector<8x256xf32>
    %c64 = arith.constant 64 : index
    %c0_46 = arith.constant 0 : index
    %183 = vector.load %arg4[%c64, %c0_46] : memref<80x256xf32, #tpu.memory_space<vmem>>, vector<8x256xf32>
    %184 = arith.addf %183, %182 : vector<8x256xf32>
    %185 = arith.negf %184 : vector<8x256xf32>
    %186 = math.exp %185 : vector<8x256xf32>
    %cst_47 = arith.constant 1.000000e+00 : f32
    %187 = vector.broadcast %cst_47 : f32 to vector<8x256xf32>
    %188 = arith.addf %187, %186 : vector<8x256xf32>
    %189 = arith.divf %187, %188 : vector<8x256xf32>
    %190 = math.tanh %184 : vector<8x256xf32>
    %191 = vector.extract_strided_slice %189 {offsets = [0, 0], sizes = [8, 64], strides = [1, 1]} : vector<8x256xf32> to vector<8x64xf32>
    %192 = vector.extract_strided_slice %189 {offsets = [0, 64], sizes = [8, 64], strides = [1, 1]} : vector<8x256xf32> to vector<8x64xf32>
    %193 = vector.extract_strided_slice %190 {offsets = [0, 128], sizes = [8, 64], strides = [1, 1]} : vector<8x256xf32> to vector<8x64xf32>
    %194 = vector.extract_strided_slice %189 {offsets = [0, 192], sizes = [8, 64], strides = [1, 1]} : vector<8x256xf32> to vector<8x64xf32>
    %195 = arith.mulf %192, %178 : vector<8x64xf32>
    %196 = arith.mulf %191, %193 : vector<8x64xf32>
    %197 = arith.addf %195, %196 : vector<8x64xf32>
    %198 = math.tanh %197 : vector<8x64xf32>
    %199 = arith.mulf %194, %198 : vector<8x64xf32>
    %200 = arith.truncf %199 : vector<8x64xf32> to vector<8x64xbf16>
    %cst_48 = arith.constant dense<0.000000e+00> : vector<8x256xf32>
    %201 = tpu.matmul %200, %1, %cst_48 {dimension_numbers = #tpu.dot_dimension_numbers<[1], [0], [0], [1], [0, 0, 1, 1], [], []>} : vector<8x64xbf16>, vector<64x256xbf16>, vector<8x256xf32> -> vector<8x256xf32>
    %c72 = arith.constant 72 : index
    %c0_49 = arith.constant 0 : index
    %202 = vector.load %arg4[%c72, %c0_49] : memref<80x256xf32, #tpu.memory_space<vmem>>, vector<8x256xf32>
    %203 = arith.addf %202, %201 : vector<8x256xf32>
    %204 = arith.negf %203 : vector<8x256xf32>
    %205 = math.exp %204 : vector<8x256xf32>
    %cst_50 = arith.constant 1.000000e+00 : f32
    %206 = vector.broadcast %cst_50 : f32 to vector<8x256xf32>
    %207 = arith.addf %206, %205 : vector<8x256xf32>
    %208 = arith.divf %206, %207 : vector<8x256xf32>
    %209 = math.tanh %203 : vector<8x256xf32>
    %210 = vector.extract_strided_slice %208 {offsets = [0, 0], sizes = [8, 64], strides = [1, 1]} : vector<8x256xf32> to vector<8x64xf32>
    %211 = vector.extract_strided_slice %208 {offsets = [0, 64], sizes = [8, 64], strides = [1, 1]} : vector<8x256xf32> to vector<8x64xf32>
    %212 = vector.extract_strided_slice %209 {offsets = [0, 128], sizes = [8, 64], strides = [1, 1]} : vector<8x256xf32> to vector<8x64xf32>
    %213 = vector.extract_strided_slice %208 {offsets = [0, 192], sizes = [8, 64], strides = [1, 1]} : vector<8x256xf32> to vector<8x64xf32>
    %214 = arith.mulf %211, %197 : vector<8x64xf32>
    %215 = arith.mulf %210, %212 : vector<8x64xf32>
    %216 = arith.addf %214, %215 : vector<8x64xf32>
    %217 = math.tanh %216 : vector<8x64xf32>
    %218 = arith.mulf %213, %217 : vector<8x64xf32>
    %219 = arith.truncf %218 : vector<8x64xf32> to vector<8x64xbf16>
    %cst_51 = arith.constant dense<0.000000e+00> : vector<8x256xf32>
    %220 = tpu.matmul %219, %2, %cst_51 {dimension_numbers = #tpu.dot_dimension_numbers<[1], [0], [0], [1], [0, 0, 1, 1], [], []>} : vector<8x64xbf16>, vector<64x256xbf16>, vector<8x256xf32> -> vector<8x256xf32>
    %221 = vector.broadcast %7 : vector<1x256xf32> to vector<8x256xf32>
    %222 = arith.addf %220, %221 : vector<8x256xf32>
    %cst_52 = arith.constant dense<0.000000e+00> : vector<8x256xf32>
    %223 = tpu.matmul %219, %3, %cst_52 {dimension_numbers = #tpu.dot_dimension_numbers<[1], [0], [0], [1], [0, 0, 1, 1], [], []>} : vector<8x64xbf16>, vector<64x256xbf16>, vector<8x256xf32> -> vector<8x256xf32>
    %224 = vector.broadcast %8 : vector<1x256xf32> to vector<8x256xf32>
    %225 = arith.addf %223, %224 : vector<8x256xf32>
    %cst_53 = arith.constant 0.000000e+00 : f32
    %226 = vector.broadcast %cst_53 : f32 to vector<1x64xf32>
    %cst_54 = arith.constant 0.000000e+00 : f32
    %227 = vector.broadcast %cst_54 : f32 to vector<1x64xf32>
    %228 = arith.truncf %226 : vector<1x64xf32> to vector<1x64xbf16>
    %cst_55 = arith.constant dense<0.000000e+00> : vector<1x256xf32>
    %229 = tpu.matmul %228, %4, %cst_55 {dimension_numbers = #tpu.dot_dimension_numbers<[1], [0], [0], [1], [0, 0, 1, 1], [], []>} : vector<1x64xbf16>, vector<64x256xbf16>, vector<1x256xf32> -> vector<1x256xf32>
    %230 = vector.extract_strided_slice %222 {offsets = [0, 0], sizes = [1, 256], strides = [1, 1]} : vector<8x256xf32> to vector<1x256xf32>
    %231 = vector.extract_strided_slice %225 {offsets = [7, 0], sizes = [1, 256], strides = [1, 1]} : vector<8x256xf32> to vector<1x256xf32>
    %232 = arith.addf %230, %231 : vector<1x256xf32>
    %233 = arith.addf %232, %229 : vector<1x256xf32>
    %234 = arith.negf %233 : vector<1x256xf32>
    %235 = math.exp %234 : vector<1x256xf32>
    %cst_56 = arith.constant 1.000000e+00 : f32
    %236 = vector.broadcast %cst_56 : f32 to vector<1x256xf32>
    %237 = arith.addf %236, %235 : vector<1x256xf32>
    %238 = arith.divf %236, %237 : vector<1x256xf32>
    %239 = math.tanh %233 : vector<1x256xf32>
    %240 = vector.extract_strided_slice %238 {offsets = [0, 0], sizes = [1, 64], strides = [1, 1]} : vector<1x256xf32> to vector<1x64xf32>
    %241 = vector.extract_strided_slice %238 {offsets = [0, 64], sizes = [1, 64], strides = [1, 1]} : vector<1x256xf32> to vector<1x64xf32>
    %242 = vector.extract_strided_slice %239 {offsets = [0, 128], sizes = [1, 64], strides = [1, 1]} : vector<1x256xf32> to vector<1x64xf32>
    %243 = vector.extract_strided_slice %238 {offsets = [0, 192], sizes = [1, 64], strides = [1, 1]} : vector<1x256xf32> to vector<1x64xf32>
    %244 = arith.mulf %241, %227 : vector<1x64xf32>
    %245 = arith.mulf %240, %242 : vector<1x64xf32>
    %246 = arith.addf %244, %245 : vector<1x64xf32>
    %247 = math.tanh %246 : vector<1x64xf32>
    %248 = arith.mulf %243, %247 : vector<1x64xf32>
    %249 = vector.extract_strided_slice %248 {offsets = [0, 0], sizes = [1, 32], strides = [1, 1]} : vector<1x64xf32> to vector<1x32xf32>
    %250 = vector.extract_strided_slice %248 {offsets = [0, 32], sizes = [1, 32], strides = [1, 1]} : vector<1x64xf32> to vector<1x32xf32>
    %251 = arith.truncf %248 : vector<1x64xf32> to vector<1x64xbf16>
    %cst_57 = arith.constant dense<0.000000e+00> : vector<1x256xf32>
    %252 = tpu.matmul %251, %4, %cst_57 {dimension_numbers = #tpu.dot_dimension_numbers<[1], [0], [0], [1], [0, 0, 1, 1], [], []>} : vector<1x64xbf16>, vector<64x256xbf16>, vector<1x256xf32> -> vector<1x256xf32>
    %253 = vector.extract_strided_slice %222 {offsets = [1, 0], sizes = [1, 256], strides = [1, 1]} : vector<8x256xf32> to vector<1x256xf32>
    %254 = vector.extract_strided_slice %225 {offsets = [6, 0], sizes = [1, 256], strides = [1, 1]} : vector<8x256xf32> to vector<1x256xf32>
    %255 = arith.addf %253, %254 : vector<1x256xf32>
    %256 = arith.addf %255, %252 : vector<1x256xf32>
    %257 = arith.negf %256 : vector<1x256xf32>
    %258 = math.exp %257 : vector<1x256xf32>
    %cst_58 = arith.constant 1.000000e+00 : f32
    %259 = vector.broadcast %cst_58 : f32 to vector<1x256xf32>
    %260 = arith.addf %259, %258 : vector<1x256xf32>
    %261 = arith.divf %259, %260 : vector<1x256xf32>
    %262 = math.tanh %256 : vector<1x256xf32>
    %263 = vector.extract_strided_slice %261 {offsets = [0, 0], sizes = [1, 64], strides = [1, 1]} : vector<1x256xf32> to vector<1x64xf32>
    %264 = vector.extract_strided_slice %261 {offsets = [0, 64], sizes = [1, 64], strides = [1, 1]} : vector<1x256xf32> to vector<1x64xf32>
    %265 = vector.extract_strided_slice %262 {offsets = [0, 128], sizes = [1, 64], strides = [1, 1]} : vector<1x256xf32> to vector<1x64xf32>
    %266 = vector.extract_strided_slice %261 {offsets = [0, 192], sizes = [1, 64], strides = [1, 1]} : vector<1x256xf32> to vector<1x64xf32>
    %267 = arith.mulf %264, %246 : vector<1x64xf32>
    %268 = arith.mulf %263, %265 : vector<1x64xf32>
    %269 = arith.addf %267, %268 : vector<1x64xf32>
    %270 = math.tanh %269 : vector<1x64xf32>
    %271 = arith.mulf %266, %270 : vector<1x64xf32>
    %272 = vector.extract_strided_slice %271 {offsets = [0, 0], sizes = [1, 32], strides = [1, 1]} : vector<1x64xf32> to vector<1x32xf32>
    %273 = vector.extract_strided_slice %271 {offsets = [0, 32], sizes = [1, 32], strides = [1, 1]} : vector<1x64xf32> to vector<1x32xf32>
    %274 = arith.truncf %271 : vector<1x64xf32> to vector<1x64xbf16>
    %cst_59 = arith.constant dense<0.000000e+00> : vector<1x256xf32>
    %275 = tpu.matmul %274, %4, %cst_59 {dimension_numbers = #tpu.dot_dimension_numbers<[1], [0], [0], [1], [0, 0, 1, 1], [], []>} : vector<1x64xbf16>, vector<64x256xbf16>, vector<1x256xf32> -> vector<1x256xf32>
    %276 = vector.extract_strided_slice %222 {offsets = [2, 0], sizes = [1, 256], strides = [1, 1]} : vector<8x256xf32> to vector<1x256xf32>
    %277 = vector.extract_strided_slice %225 {offsets = [5, 0], sizes = [1, 256], strides = [1, 1]} : vector<8x256xf32> to vector<1x256xf32>
    %278 = arith.addf %276, %277 : vector<1x256xf32>
    %279 = arith.addf %278, %275 : vector<1x256xf32>
    %280 = arith.negf %279 : vector<1x256xf32>
    %281 = math.exp %280 : vector<1x256xf32>
    %cst_60 = arith.constant 1.000000e+00 : f32
    %282 = vector.broadcast %cst_60 : f32 to vector<1x256xf32>
    %283 = arith.addf %282, %281 : vector<1x256xf32>
    %284 = arith.divf %282, %283 : vector<1x256xf32>
    %285 = math.tanh %279 : vector<1x256xf32>
    %286 = vector.extract_strided_slice %284 {offsets = [0, 0], sizes = [1, 64], strides = [1, 1]} : vector<1x256xf32> to vector<1x64xf32>
    %287 = vector.extract_strided_slice %284 {offsets = [0, 64], sizes = [1, 64], strides = [1, 1]} : vector<1x256xf32> to vector<1x64xf32>
    %288 = vector.extract_strided_slice %285 {offsets = [0, 128], sizes = [1, 64], strides = [1, 1]} : vector<1x256xf32> to vector<1x64xf32>
    %289 = vector.extract_strided_slice %284 {offsets = [0, 192], sizes = [1, 64], strides = [1, 1]} : vector<1x256xf32> to vector<1x64xf32>
    %290 = arith.mulf %287, %269 : vector<1x64xf32>
    %291 = arith.mulf %286, %288 : vector<1x64xf32>
    %292 = arith.addf %290, %291 : vector<1x64xf32>
    %293 = math.tanh %292 : vector<1x64xf32>
    %294 = arith.mulf %289, %293 : vector<1x64xf32>
    %295 = vector.extract_strided_slice %294 {offsets = [0, 0], sizes = [1, 32], strides = [1, 1]} : vector<1x64xf32> to vector<1x32xf32>
    %296 = vector.extract_strided_slice %294 {offsets = [0, 32], sizes = [1, 32], strides = [1, 1]} : vector<1x64xf32> to vector<1x32xf32>
    %297 = arith.truncf %294 : vector<1x64xf32> to vector<1x64xbf16>
    %cst_61 = arith.constant dense<0.000000e+00> : vector<1x256xf32>
    %298 = tpu.matmul %297, %4, %cst_61 {dimension_numbers = #tpu.dot_dimension_numbers<[1], [0], [0], [1], [0, 0, 1, 1], [], []>} : vector<1x64xbf16>, vector<64x256xbf16>, vector<1x256xf32> -> vector<1x256xf32>
    %299 = vector.extract_strided_slice %222 {offsets = [3, 0], sizes = [1, 256], strides = [1, 1]} : vector<8x256xf32> to vector<1x256xf32>
    %300 = vector.extract_strided_slice %225 {offsets = [4, 0], sizes = [1, 256], strides = [1, 1]} : vector<8x256xf32> to vector<1x256xf32>
    %301 = arith.addf %299, %300 : vector<1x256xf32>
    %302 = arith.addf %301, %298 : vector<1x256xf32>
    %303 = arith.negf %302 : vector<1x256xf32>
    %304 = math.exp %303 : vector<1x256xf32>
    %cst_62 = arith.constant 1.000000e+00 : f32
    %305 = vector.broadcast %cst_62 : f32 to vector<1x256xf32>
    %306 = arith.addf %305, %304 : vector<1x256xf32>
    %307 = arith.divf %305, %306 : vector<1x256xf32>
    %308 = math.tanh %302 : vector<1x256xf32>
    %309 = vector.extract_strided_slice %307 {offsets = [0, 0], sizes = [1, 64], strides = [1, 1]} : vector<1x256xf32> to vector<1x64xf32>
    %310 = vector.extract_strided_slice %307 {offsets = [0, 64], sizes = [1, 64], strides = [1, 1]} : vector<1x256xf32> to vector<1x64xf32>
    %311 = vector.extract_strided_slice %308 {offsets = [0, 128], sizes = [1, 64], strides = [1, 1]} : vector<1x256xf32> to vector<1x64xf32>
    %312 = vector.extract_strided_slice %307 {offsets = [0, 192], sizes = [1, 64], strides = [1, 1]} : vector<1x256xf32> to vector<1x64xf32>
    %313 = arith.mulf %310, %292 : vector<1x64xf32>
    %314 = arith.mulf %309, %311 : vector<1x64xf32>
    %315 = arith.addf %313, %314 : vector<1x64xf32>
    %316 = math.tanh %315 : vector<1x64xf32>
    %317 = arith.mulf %312, %316 : vector<1x64xf32>
    %318 = vector.extract_strided_slice %317 {offsets = [0, 0], sizes = [1, 32], strides = [1, 1]} : vector<1x64xf32> to vector<1x32xf32>
    %319 = vector.extract_strided_slice %317 {offsets = [0, 32], sizes = [1, 32], strides = [1, 1]} : vector<1x64xf32> to vector<1x32xf32>
    %320 = arith.truncf %317 : vector<1x64xf32> to vector<1x64xbf16>
    %cst_63 = arith.constant dense<0.000000e+00> : vector<1x256xf32>
    %321 = tpu.matmul %320, %4, %cst_63 {dimension_numbers = #tpu.dot_dimension_numbers<[1], [0], [0], [1], [0, 0, 1, 1], [], []>} : vector<1x64xbf16>, vector<64x256xbf16>, vector<1x256xf32> -> vector<1x256xf32>
    %322 = vector.extract_strided_slice %222 {offsets = [4, 0], sizes = [1, 256], strides = [1, 1]} : vector<8x256xf32> to vector<1x256xf32>
    %323 = vector.extract_strided_slice %225 {offsets = [3, 0], sizes = [1, 256], strides = [1, 1]} : vector<8x256xf32> to vector<1x256xf32>
    %324 = arith.addf %322, %323 : vector<1x256xf32>
    %325 = arith.addf %324, %321 : vector<1x256xf32>
    %326 = arith.negf %325 : vector<1x256xf32>
    %327 = math.exp %326 : vector<1x256xf32>
    %cst_64 = arith.constant 1.000000e+00 : f32
    %328 = vector.broadcast %cst_64 : f32 to vector<1x256xf32>
    %329 = arith.addf %328, %327 : vector<1x256xf32>
    %330 = arith.divf %328, %329 : vector<1x256xf32>
    %331 = math.tanh %325 : vector<1x256xf32>
    %332 = vector.extract_strided_slice %330 {offsets = [0, 0], sizes = [1, 64], strides = [1, 1]} : vector<1x256xf32> to vector<1x64xf32>
    %333 = vector.extract_strided_slice %330 {offsets = [0, 64], sizes = [1, 64], strides = [1, 1]} : vector<1x256xf32> to vector<1x64xf32>
    %334 = vector.extract_strided_slice %331 {offsets = [0, 128], sizes = [1, 64], strides = [1, 1]} : vector<1x256xf32> to vector<1x64xf32>
    %335 = vector.extract_strided_slice %330 {offsets = [0, 192], sizes = [1, 64], strides = [1, 1]} : vector<1x256xf32> to vector<1x64xf32>
    %336 = arith.mulf %333, %315 : vector<1x64xf32>
    %337 = arith.mulf %332, %334 : vector<1x64xf32>
    %338 = arith.addf %336, %337 : vector<1x64xf32>
    %339 = math.tanh %338 : vector<1x64xf32>
    %340 = arith.mulf %335, %339 : vector<1x64xf32>
    %341 = vector.extract_strided_slice %340 {offsets = [0, 0], sizes = [1, 32], strides = [1, 1]} : vector<1x64xf32> to vector<1x32xf32>
    %342 = vector.extract_strided_slice %340 {offsets = [0, 32], sizes = [1, 32], strides = [1, 1]} : vector<1x64xf32> to vector<1x32xf32>
    %343 = arith.truncf %340 : vector<1x64xf32> to vector<1x64xbf16>
    %cst_65 = arith.constant dense<0.000000e+00> : vector<1x256xf32>
    %344 = tpu.matmul %343, %4, %cst_65 {dimension_numbers = #tpu.dot_dimension_numbers<[1], [0], [0], [1], [0, 0, 1, 1], [], []>} : vector<1x64xbf16>, vector<64x256xbf16>, vector<1x256xf32> -> vector<1x256xf32>
    %345 = vector.extract_strided_slice %222 {offsets = [5, 0], sizes = [1, 256], strides = [1, 1]} : vector<8x256xf32> to vector<1x256xf32>
    %346 = vector.extract_strided_slice %225 {offsets = [2, 0], sizes = [1, 256], strides = [1, 1]} : vector<8x256xf32> to vector<1x256xf32>
    %347 = arith.addf %345, %346 : vector<1x256xf32>
    %348 = arith.addf %347, %344 : vector<1x256xf32>
    %349 = arith.negf %348 : vector<1x256xf32>
    %350 = math.exp %349 : vector<1x256xf32>
    %cst_66 = arith.constant 1.000000e+00 : f32
    %351 = vector.broadcast %cst_66 : f32 to vector<1x256xf32>
    %352 = arith.addf %351, %350 : vector<1x256xf32>
    %353 = arith.divf %351, %352 : vector<1x256xf32>
    %354 = math.tanh %348 : vector<1x256xf32>
    %355 = vector.extract_strided_slice %353 {offsets = [0, 0], sizes = [1, 64], strides = [1, 1]} : vector<1x256xf32> to vector<1x64xf32>
    %356 = vector.extract_strided_slice %353 {offsets = [0, 64], sizes = [1, 64], strides = [1, 1]} : vector<1x256xf32> to vector<1x64xf32>
    %357 = vector.extract_strided_slice %354 {offsets = [0, 128], sizes = [1, 64], strides = [1, 1]} : vector<1x256xf32> to vector<1x64xf32>
    %358 = vector.extract_strided_slice %353 {offsets = [0, 192], sizes = [1, 64], strides = [1, 1]} : vector<1x256xf32> to vector<1x64xf32>
    %359 = arith.mulf %356, %338 : vector<1x64xf32>
    %360 = arith.mulf %355, %357 : vector<1x64xf32>
    %361 = arith.addf %359, %360 : vector<1x64xf32>
    %362 = math.tanh %361 : vector<1x64xf32>
    %363 = arith.mulf %358, %362 : vector<1x64xf32>
    %364 = vector.extract_strided_slice %363 {offsets = [0, 0], sizes = [1, 32], strides = [1, 1]} : vector<1x64xf32> to vector<1x32xf32>
    %365 = vector.extract_strided_slice %363 {offsets = [0, 32], sizes = [1, 32], strides = [1, 1]} : vector<1x64xf32> to vector<1x32xf32>
    %366 = arith.truncf %363 : vector<1x64xf32> to vector<1x64xbf16>
    %cst_67 = arith.constant dense<0.000000e+00> : vector<1x256xf32>
    %367 = tpu.matmul %366, %4, %cst_67 {dimension_numbers = #tpu.dot_dimension_numbers<[1], [0], [0], [1], [0, 0, 1, 1], [], []>} : vector<1x64xbf16>, vector<64x256xbf16>, vector<1x256xf32> -> vector<1x256xf32>
    %368 = vector.extract_strided_slice %222 {offsets = [6, 0], sizes = [1, 256], strides = [1, 1]} : vector<8x256xf32> to vector<1x256xf32>
    %369 = vector.extract_strided_slice %225 {offsets = [1, 0], sizes = [1, 256], strides = [1, 1]} : vector<8x256xf32> to vector<1x256xf32>
    %370 = arith.addf %368, %369 : vector<1x256xf32>
    %371 = arith.addf %370, %367 : vector<1x256xf32>
    %372 = arith.negf %371 : vector<1x256xf32>
    %373 = math.exp %372 : vector<1x256xf32>
    %cst_68 = arith.constant 1.000000e+00 : f32
    %374 = vector.broadcast %cst_68 : f32 to vector<1x256xf32>
    %375 = arith.addf %374, %373 : vector<1x256xf32>
    %376 = arith.divf %374, %375 : vector<1x256xf32>
    %377 = math.tanh %371 : vector<1x256xf32>
    %378 = vector.extract_strided_slice %376 {offsets = [0, 0], sizes = [1, 64], strides = [1, 1]} : vector<1x256xf32> to vector<1x64xf32>
    %379 = vector.extract_strided_slice %376 {offsets = [0, 64], sizes = [1, 64], strides = [1, 1]} : vector<1x256xf32> to vector<1x64xf32>
    %380 = vector.extract_strided_slice %377 {offsets = [0, 128], sizes = [1, 64], strides = [1, 1]} : vector<1x256xf32> to vector<1x64xf32>
    %381 = vector.extract_strided_slice %376 {offsets = [0, 192], sizes = [1, 64], strides = [1, 1]} : vector<1x256xf32> to vector<1x64xf32>
    %382 = arith.mulf %379, %361 : vector<1x64xf32>
    %383 = arith.mulf %378, %380 : vector<1x64xf32>
    %384 = arith.addf %382, %383 : vector<1x64xf32>
    %385 = math.tanh %384 : vector<1x64xf32>
    %386 = arith.mulf %381, %385 : vector<1x64xf32>
    %387 = vector.extract_strided_slice %386 {offsets = [0, 0], sizes = [1, 32], strides = [1, 1]} : vector<1x64xf32> to vector<1x32xf32>
    %388 = vector.extract_strided_slice %386 {offsets = [0, 32], sizes = [1, 32], strides = [1, 1]} : vector<1x64xf32> to vector<1x32xf32>
    %389 = arith.truncf %386 : vector<1x64xf32> to vector<1x64xbf16>
    %cst_69 = arith.constant dense<0.000000e+00> : vector<1x256xf32>
    %390 = tpu.matmul %389, %4, %cst_69 {dimension_numbers = #tpu.dot_dimension_numbers<[1], [0], [0], [1], [0, 0, 1, 1], [], []>} : vector<1x64xbf16>, vector<64x256xbf16>, vector<1x256xf32> -> vector<1x256xf32>
    %391 = vector.extract_strided_slice %222 {offsets = [7, 0], sizes = [1, 256], strides = [1, 1]} : vector<8x256xf32> to vector<1x256xf32>
    %392 = vector.extract_strided_slice %225 {offsets = [0, 0], sizes = [1, 256], strides = [1, 1]} : vector<8x256xf32> to vector<1x256xf32>
    %393 = arith.addf %391, %392 : vector<1x256xf32>
    %394 = arith.addf %393, %390 : vector<1x256xf32>
    %395 = arith.negf %394 : vector<1x256xf32>
    %396 = math.exp %395 : vector<1x256xf32>
    %cst_70 = arith.constant 1.000000e+00 : f32
    %397 = vector.broadcast %cst_70 : f32 to vector<1x256xf32>
    %398 = arith.addf %397, %396 : vector<1x256xf32>
    %399 = arith.divf %397, %398 : vector<1x256xf32>
    %400 = math.tanh %394 : vector<1x256xf32>
    %401 = vector.extract_strided_slice %399 {offsets = [0, 0], sizes = [1, 64], strides = [1, 1]} : vector<1x256xf32> to vector<1x64xf32>
    %402 = vector.extract_strided_slice %399 {offsets = [0, 64], sizes = [1, 64], strides = [1, 1]} : vector<1x256xf32> to vector<1x64xf32>
    %403 = vector.extract_strided_slice %400 {offsets = [0, 128], sizes = [1, 64], strides = [1, 1]} : vector<1x256xf32> to vector<1x64xf32>
    %404 = vector.extract_strided_slice %399 {offsets = [0, 192], sizes = [1, 64], strides = [1, 1]} : vector<1x256xf32> to vector<1x64xf32>
    %405 = arith.mulf %402, %384 : vector<1x64xf32>
    %406 = arith.mulf %401, %403 : vector<1x64xf32>
    %407 = arith.addf %405, %406 : vector<1x64xf32>
    %408 = math.tanh %407 : vector<1x64xf32>
    %409 = arith.mulf %404, %408 : vector<1x64xf32>
    %410 = vector.extract_strided_slice %409 {offsets = [0, 0], sizes = [1, 32], strides = [1, 1]} : vector<1x64xf32> to vector<1x32xf32>
    %411 = vector.extract_strided_slice %409 {offsets = [0, 32], sizes = [1, 32], strides = [1, 1]} : vector<1x64xf32> to vector<1x32xf32>
    %412 = tpu.concatenate %249, %272, %295, %318, %341, %364, %387, %410 in 0 : vector<1x32xf32>, vector<1x32xf32>, vector<1x32xf32>, vector<1x32xf32>, vector<1x32xf32>, vector<1x32xf32>, vector<1x32xf32>, vector<1x32xf32> -> vector<8x32xf32>
    %413 = tpu.concatenate %411, %388, %365, %342, %319, %296, %273, %250 in 0 : vector<1x32xf32>, vector<1x32xf32>, vector<1x32xf32>, vector<1x32xf32>, vector<1x32xf32>, vector<1x32xf32>, vector<1x32xf32>, vector<1x32xf32> -> vector<8x32xf32>
    %414 = tpu.concatenate %412, %413 in 1 : vector<8x32xf32>, vector<8x32xf32> -> vector<8x64xf32>
    %415 = arith.truncf %414 : vector<8x64xf32> to vector<8x64xbf16>
    %cst_71 = arith.constant dense<0.000000e+00> : vector<8x128xf32>
    %416 = tpu.matmul %415, %5, %cst_71 {dimension_numbers = #tpu.dot_dimension_numbers<[1], [0], [0], [1], [0, 0, 1, 1], [], []>} : vector<8x64xbf16>, vector<64x128xbf16>, vector<8x128xf32> -> vector<8x128xf32>
    %417 = vector.broadcast %9 : vector<1x128xf32> to vector<8x128xf32>
    %418 = arith.addf %416, %417 : vector<8x128xf32>
    %c0_72 = arith.constant 0 : index
    %c0_73 = arith.constant 0 : index
    %419 = vector.load %arg3[%c0_72, %c0_73] : memref<8x128xf32, #tpu.memory_space<vmem>>, vector<8x128xf32>
    tpu.vector_store %arg3[%c0_72, %c0_73], %418 {strides = array<i32>} : memref<8x128xf32, #tpu.memory_space<vmem>>, vector<8x128xf32>,
    return
  }
}

</mosaic_0001>

<llo_original>
// kernel: tagger_forward.1
$region0: #{tagger_forward.1}
  #allocation0 [shape = 'u32[]', space=smem, size = 0x4, offset = 0x4, fixed_abs, tag = 'smem constant byte address 0x4 - core index']
  #allocation1 [shape = 'u32[144,128]{1,0:T(1,128)}', space=vmem, size = 0x12000, scoped, tag = 'internal scratch']
  #allocation2 [shape = 'f32[80,256]{1,0:T(8,128)}', space=vmem, size = 0x14000, scoped, tag = 'scratch operand']
  %s0 = inlined_call_operand.vmem [shape: s32[80,2], index: 0, kind: input, shape index: {}]
  %s1 = inlined_call_operand.vmem [shape: bf16[368,256], index: 1, kind: input, shape index: {}]
  %s2 = inlined_call_operand.vmem [shape: f32[4,256], index: 2, kind: input, shape index: {}]
  %s3 = inlined_call_operand.hbm [shape: f32[8,128], index: 3, kind: output, shape index: {}]
  %s4 = sld [smem:[#allocation0]]
  $region22: #{tagger_forward.1} parent=0
    _
  %s6 = ssub.s32 1, %s4
  %s7 = scalar_select 0, %s6, %s4
  $region1: #{tagger_forward.1} parent=0
    #allocation3 [shape = 'u8[4096]{0}', space=vmem, size = 0x1000, scoped, tag = 'output window, operand 0, single buffered']
    #allocation4 [shape = 's32[1]{0}', space=sflag, size = 0x4, scoped, tag = 'scoped memory for tagger_forward.1']
    %8 = vsyncpa [#allocation4], 0
    // Predicated region
    $region2: #{tagger_forward.1} parent=1 // pred_check
      _
    $region3: #{tagger_forward.1} parent=1 // pred_check_branch
      %10 = sbr.rel (0) target = $region5
    $region4: #{tagger_forward.1} parent=1 // pred_region
      _
    $region5: #{tagger_forward.1} parent=1 // pred_fallthru
      _
    // Predicated region
    $region6: #{tagger_forward.1} parent=1 // pred_check
      _
    $region7: #{tagger_forward.1} parent=1 // pred_check_branch
      %12 = sbr.rel (0) target = $region9
    $region8: #{tagger_forward.1} parent=1 // pred_region
      _
    $region9: #{tagger_forward.1} parent=1 // pred_fallthru
      _
    // Predicated region
    $region10: #{tagger_forward.1} parent=1 // pred_check
      _
    $region11: #{tagger_forward.1} parent=1 // pred_check_branch
      %14 = sbr.rel (0) target = $region13
    $region12: #{tagger_forward.1} parent=1 // pred_region
      _
    $region13: #{tagger_forward.1} parent=1 // pred_fallthru
      _
    %v16 = vld [vmem:[%s1] sm:$0xff]
    %v17 = vld [vmem:[%s1 + $0x8] sm:$0xff]
    %v18 = vld [vmem:[%s1 + $0x10] sm:$0xff]
    %v19 = vld [vmem:[%s1 + $0x18] sm:$0xff]
    %v20 = vld [vmem:[%s1 + $0x20] sm:$0xff]
    %v21 = vld [vmem:[%s1 + $0x28] sm:$0xff]
    %v22 = vld [vmem:[%s1 + $0x30] sm:$0xff]
    %v23 = vld [vmem:[%s1 + $0x38] sm:$0xff]
    %v24 = vld [vmem:[%s1 + $0x40] sm:$0xff]
    %v25 = vld [vmem:[%s1 + $0x48] sm:$0xff]
    %v26 = vld [vmem:[%s1 + $0x50] sm:$0xff]
    %v27 = vld [vmem:[%s1 + $0x58] sm:$0xff]
    %v28 = vld [vmem:[%s1 + $0x60] sm:$0xff]
    %v29 = vld [vmem:[%s1 + $0x68] sm:$0xff]
    %v30 = vld [vmem:[%s1 + $0x70] sm:$0xff]
    %v31 = vld [vmem:[%s1 + $0x78] sm:$0xff]
    %v32 = vld [vmem:[%s1 + $0x80] sm:$0xff]
    %v33 = vld [vmem:[%s1 + $0x88] sm:$0xff]
    %v34 = vld [vmem:[%s1 + $0x90] sm:$0xff]
    %v35 = vld [vmem:[%s1 + $0x98] sm:$0xff]
    %v36 = vld [vmem:[%s1 + $0xa0] sm:$0xff]
    %v37 = vld [vmem:[%s1 + $0xa8] sm:$0xff]
    %v38 = vld [vmem:[%s1 + $0xb0] sm:$0xff]
    %v39 = vld [vmem:[%s1 + $0xb8] sm:$0xff]
    %v40 = vld [vmem:[%s1 + $0xc0] sm:$0xff]
    %v41 = vld [vmem:[%s1 + $0xc8] sm:$0xff]
    %v42 = vld [vmem:[%s1 + $0xd0] sm:$0xff]
    %v43 = vld [vmem:[%s1 + $0xd8] sm:$0xff]
    %v44 = vld [vmem:[%s1 + $0xe0] sm:$0xff]
    %v45 = vld [vmem:[%s1 + $0xe8] sm:$0xff]
    %v46 = vld [vmem:[%s1 + $0xf0] sm:$0xff]
    %v47 = vld [vmem:[%s1 + $0xf8] sm:$0xff]
    %v48 = vld [vmem:[%s1 + $0x100] sm:$0xff]
    %v49 = vld [vmem:[%s1 + $0x108] sm:$0xff]
    %v50 = vld [vmem:[%s1 + $0x110] sm:$0xff]
    %v51 = vld [vmem:[%s1 + $0x118] sm:$0xff]
    %v52 = vld [vmem:[%s1 + $0x120] sm:$0xff]
    %v53 = vld [vmem:[%s1 + $0x128] sm:$0xff]
    %v54 = vld [vmem:[%s1 + $0x130] sm:$0xf]
    %v55 = vld [vmem:[%s1 + $0x138] sm:$0xf]
    %v56 = vld [vmem:[%s1 + $0x140] sm:$0xf]
    %v57 = vld [vmem:[%s1 + $0x148] sm:$0xf]
    %v58 = vld [vmem:[%s1 + $0x150] sm:$0xf]
    %v59 = vld [vmem:[%s1 + $0x158] sm:$0xf]
    %v60 = vld [vmem:[%s1 + $0x160] sm:$0xf]
    %v61 = vld [vmem:[%s1 + $0x168] sm:$0xf]
    %v62 = vld [vmem:[%s2] ss:$4 sm:$0x3]
    %s63 = scalar_lea.vmem %s2, 1
    %v64 = vld [vmem:[%s63] ss:$4 sm:$0x3]
    %s65 = scalar_lea.vmem %s2, 2
    %v66 = vld [vmem:[%s65] ss:$4 sm:$0x3]
    %v67 = vld [vmem:[%s2 + $0x3] sm:$0x1]
    %v68 = vld [vmem:[%s0] sm:$0xff]
    %v69 = vld [vmem:[%s0 + $0x8] sm:$0xff]
    %v70 = vld [vmem:[%s0 + $0x10] sm:$0xff]
    %v71 = vld [vmem:[%s0 + $0x18] sm:$0xff]
    %v72 = vld [vmem:[%s0 + $0x20] sm:$0xff]
    %v73 = vld [vmem:[%s0 + $0x28] sm:$0xff]
    %v74 = vld [vmem:[%s0 + $0x30] sm:$0xff]
    %v75 = vld [vmem:[%s0 + $0x38] sm:$0xff]
    %v76 = vld [vmem:[%s0 + $0x40] sm:$0xff]
    %v77 = vld [vmem:[%s0 + $0x48] sm:$0xff]
    %v78 = vlaneseq
    %v79 = vand.u32 %v78, 127
    %80 = vset.pattern.permute.xlu0 0
    %81 = vperm.xlu0 %80, %v68
    %v82 = vpop.permute.xlu0 %81
    %83 = vset.pattern.permute.xlu0 0
    %84 = vperm.xlu0 %83, %v69
    %v85 = vpop.permute.xlu0 %84
    %86 = vset.pattern.permute.xlu0 0
    %87 = vperm.xlu0 %86, %v70
    %v88 = vpop.permute.xlu0 %87
    %89 = vset.pattern.permute.xlu0 0
    %90 = vperm.xlu0 %89, %v71
    %v91 = vpop.permute.xlu0 %90
    %92 = vset.pattern.permute.xlu0 0
    %93 = vperm.xlu0 %92, %v72
    %v94 = vpop.permute.xlu0 %93
    %95 = vset.pattern.permute.xlu0 0
    %96 = vperm.xlu0 %95, %v73
    %v97 = vpop.permute.xlu0 %96
    %98 = vset.pattern.permute.xlu0 0
    %99 = vperm.xlu0 %98, %v74
    %v100 = vpop.permute.xlu0 %99
    %101 = vset.pattern.permute.xlu0 0
    %102 = vperm.xlu0 %101, %v75
    %v103 = vpop.permute.xlu0 %102
    %104 = vset.pattern.permute.xlu0 0
    %105 = vperm.xlu0 %104, %v76
    %v106 = vpop.permute.xlu0 %105
    %107 = vset.pattern.permute.xlu0 0
    %108 = vperm.xlu0 %107, %v77
    %v109 = vpop.permute.xlu0 %108
    %vm110 = vcmp.eq.s32.totalorder %v79, %v82
    %vm111 = vcmp.eq.s32.totalorder %v79, %v85
    %vm112 = vcmp.eq.s32.totalorder %v79, %v88
    %vm113 = vcmp.eq.s32.totalorder %v79, %v91
    %vm114 = vcmp.eq.s32.totalorder %v79, %v94
    %vm115 = vcmp.eq.s32.totalorder %v79, %v97
    %vm116 = vcmp.eq.s32.totalorder %v79, %v100
    %vm117 = vcmp.eq.s32.totalorder %v79, %v103
    %vm118 = vcmp.eq.s32.totalorder %v79, %v106
    %vm119 = vcmp.eq.s32.totalorder %v79, %v109
    %120 = vset.pattern.permute.xlu0 1
    %121 = vperm.xlu0 %120, %v68
    %v122 = vpop.permute.xlu0 %121
    %123 = vset.pattern.permute.xlu0 1
    %124 = vperm.xlu0 %123, %v69
    %v125 = vpop.permute.xlu0 %124
    %126 = vset.pattern.permute.xlu0 1
    %127 = vperm.xlu0 %126, %v70
    %v128 = vpop.permute.xlu0 %127
    %129 = vset.pattern.permute.xlu0 1
    %130 = vperm.xlu0 %129, %v71
    %v131 = vpop.permute.xlu0 %130
    %132 = vset.pattern.permute.xlu0 1
    %133 = vperm.xlu0 %132, %v72
    %v134 = vpop.permute.xlu0 %133
    %135 = vset.pattern.permute.xlu0 1
    %136 = vperm.xlu0 %135, %v73
    %v137 = vpop.permute.xlu0 %136
    %138 = vset.pattern.permute.xlu0 1
    %139 = vperm.xlu0 %138, %v74
    %v140 = vpop.permute.xlu0 %139
    %141 = vset.pattern.permute.xlu0 1
    %142 = vperm.xlu0 %141, %v75
    %v143 = vpop.permute.xlu0 %142
    %144 = vset.pattern.permute.xlu0 1
    %145 = vperm.xlu0 %144, %v76
    %v146 = vpop.permute.xlu0 %145
    %147 = vset.pattern.permute.xlu0 1
    %148 = vperm.xlu0 %147, %v77
    %v149 = vpop.permute.xlu0 %148
    %vm150 = vcmp.eq.s32.totalorder %v79, %v122
    %vm151 = vcmp.eq.s32.totalorder %v79, %v125
    %vm152 = vcmp.eq.s32.totalorder %v79, %v128
    %vm153 = vcmp.eq.s32.totalorder %v79, %v131
    %vm154 = vcmp.eq.s32.totalorder %v79, %v134
    %vm155 = vcmp.eq.s32.totalorder %v79, %v137
    %vm156 = vcmp.eq.s32.totalorder %v79, %v140
    %vm157 = vcmp.eq.s32.totalorder %v79, %v143
    %vm158 = vcmp.eq.s32.totalorder %v79, %v146
    %vm159 = vcmp.eq.s32.totalorder %v79, %v149
    %vm160 = vmor %vm110, %vm150
    %vm161 = vmor %vm111, %vm151
    %vm162 = vmor %vm112, %vm152
    %vm163 = vmor %vm113, %vm153
    %vm164 = vmor %vm114, %vm154
    %vm165 = vmor %vm115, %vm155
    %vm166 = vmor %vm116, %vm156
    %vm167 = vmor %vm117, %vm157
    %vm168 = vmor %vm118, %vm158
    %vm169 = vmor %vm119, %vm159
    %v170 = vsel %vm160, 1.0, 0.0
    %v171 = vsel %vm161, 1.0, 0.0
    %v172 = vsel %vm162, 1.0, 0.0
    %v173 = vsel %vm163, 1.0, 0.0
    %v174 = vsel %vm164, 1.0, 0.0
    %v175 = vsel %vm165, 1.0, 0.0
    %v176 = vsel %vm166, 1.0, 0.0
    %v177 = vsel %vm167, 1.0, 0.0
    %v178 = vsel %vm168, 1.0, 0.0
    %v179 = vsel %vm169, 1.0, 0.0
    %v180 = vpack.c.bf16 %v171, %v170
    %v181 = vpack.c.bf16 %v173, %v172
    %v182 = vpack.c.bf16 %v175, %v174
    %v183 = vpack.c.bf16 %v177, %v176
    %v184 = vpack.c.bf16 %v179, %v178
    %v186 = vlaneseq
    %v187 = vshrl.u32 %v186, 7
    %v188 = vsub.s32 0, %v187
    %v189 = vrot.slane %v62, %v188
    %v190 = vlaneseq
    %v191 = vshrl.u32 %v190, 7
    %v192 = vsub.s32 1, %v191
    %v193 = vrot.slane %v62, %v192
    %v202 = vunpack.c.l.b16 %v16
    %v203 = vunpack.c.h.b16 %v16
    %v204 = vunpack.c.l.b16 %v17
    %v205 = vunpack.c.h.b16 %v17
    %v206 = vunpack.c.l.b16 %v18
    %v207 = vunpack.c.h.b16 %v18
    %v208 = vunpack.c.l.b16 %v19
    %v209 = vunpack.c.h.b16 %v19
    %v210 = vunpack.c.l.b16 %v20
    %v211 = vunpack.c.h.b16 %v20
    %v212 = vunpack.c.l.b16 %v21
    %v213 = vunpack.c.h.b16 %v21
    %v214 = vpack.c.b16 %v204, %v202
    %v215 = vpack.c.b16 %v205, %v203
    %v216 = vpack.c.b16 %v208, %v206
    %v217 = vpack.c.b16 %v209, %v207
    %v218 = vpack.c.b16 %v212, %v210
    %v219 = vpack.c.b16 %v213, %v211
    %vm226 = vcmask 392192
    %v228 = vsel %vm226, %v180, 0
    %v231 = vsel %vm226, %v181, 0
    %v234 = vsel %vm226, %v182, 0
    %v237 = vsel %vm226, %v183, 0
    %v240 = vsel %vm226, %v184, 0
    %242 = vmatprep.subr.bf16.mxu0 0
    %243 = vmatpush1.bf16.msra.mxu0 0
    %244 = vmatprep.subr.bf16.mxu0 0
    %245 = vmatpush1.bf16.msra.mxu0 0
    %246 = vmatprep.subr.bf16.mxu0 0
    %247 = vmatpush1.bf16.msra.mxu0 0
    %248 = vmatprep.subr.bf16.mxu0 0
    %249 = vmatpush1.bf16.msra.mxu0 0
    %250 = vmatprep.subr.bf16.mxu0 0
    %251 = vmatpush1.bf16.msra.mxu0 0
    %252 = vmatprep.subr.bf16.mxu0 %v219
    %253 = vmatpush1.bf16.msra.mxu0 %v218
    %254 = vmatprep.subr.bf16.mxu0 %v217
    %255 = vmatpush1.bf16.msra.mxu0 %v216
    %256 = vmatprep.subr.bf16.mxu0 %v215
    %257 = vmatpush1.bf16.msra.mxu0 %v214
    %258 = vmatprep.subr.bf16.mxu0 0
    %259 = vmatpush2.bf16.msra.mxu0 0
    %260 = vmatprep.subr.bf16.mxu0 0
    %261 = vmatpush2.bf16.msra.mxu0 0
    %262 = vmatprep.subr.bf16.mxu0 0
    %263 = vmatpush2.bf16.msra.mxu0 0
    %264 = vmatprep.subr.bf16.mxu0 0
    %265 = vmatpush2.bf16.msra.mxu0 0
    %266 = vmatprep.subr.bf16.mxu0 0
    %267 = vmatpush2.bf16.msra.mxu0 0
    %268 = vmatprep.subr.bf16.mxu0 0
    %269 = vmatpush2.bf16.msra.mxu0 0
    %270 = vmatprep.subr.bf16.mxu0 0
    %271 = vmatpush2.bf16.msra.mxu0 0
    %272 = vmatprep.subr.bf16.mxu0 0
    %273 = vmatpush2.bf16.msra.mxu0 0
    %274 = vmatprep.mubr.bf16.mxu0 0
    %275 = vmatmul.mubr.bf16.gmra.mxu0 %v228
    %v276 = vpop.f32.mrf.mxu0
    %v277 = vadd.f32 %v189, %v276
    %v278 = vpop.f32.mrf.mxu0
    %v279 = vadd.f32 %v193, %v278
    %v280 = vpop.f32.mrf.mxu0
    %v281 = vadd.f32 %v189, %v280
    %v282 = vpop.f32.mrf.mxu0
    %v283 = vadd.f32 %v193, %v282
    %284 = vmatprep.mubr.bf16.mxu0 0
    %285 = vmatmul.mubr.bf16.gmra.mxu0 %v231
    %v286 = vpop.f32.mrf.mxu0
    %v287 = vadd.f32 %v189, %v286
    %v288 = vpop.f32.mrf.mxu0
    %v289 = vadd.f32 %v193, %v288
    %v290 = vpop.f32.mrf.mxu0
    %v291 = vadd.f32 %v189, %v290
    %v292 = vpop.f32.mrf.mxu0
    %v293 = vadd.f32 %v193, %v292
    %294 = vmatprep.mubr.bf16.mxu0 0
    %295 = vmatmul.mubr.bf16.gmra.mxu0 %v234
    %v296 = vpop.f32.mrf.mxu0
    %v297 = vadd.f32 %v189, %v296
    %v298 = vpop.f32.mrf.mxu0
    %v299 = vadd.f32 %v193, %v298
    %v300 = vpop.f32.mrf.mxu0
    %v301 = vadd.f32 %v189, %v300
    %v302 = vpop.f32.mrf.mxu0
    %v303 = vadd.f32 %v193, %v302
    %304 = vmatprep.mubr.bf16.mxu0 0
    %305 = vmatmul.mubr.bf16.gmra.mxu0 %v237
    %v306 = vpop.f32.mrf.mxu0
    %v307 = vadd.f32 %v189, %v306
    %v308 = vpop.f32.mrf.mxu0
    %v309 = vadd.f32 %v193, %v308
    %v310 = vpop.f32.mrf.mxu0
    %v311 = vadd.f32 %v189, %v310
    %v312 = vpop.f32.mrf.mxu0
    %v313 = vadd.f32 %v193, %v312
    %314 = vmatprep.mubr.bf16.mxu0 0
    %315 = vmatmul.mubr.bf16.gmra.mxu0 %v240
    %v316 = vpop.f32.mrf.mxu0
    %v317 = vadd.f32 %v189, %v316
    %v318 = vpop.f32.mrf.mxu0
    %v319 = vadd.f32 %v193, %v318
    %v320 = vpop.f32.mrf.mxu0
    %v321 = vadd.f32 %v189, %v320
    %v322 = vpop.f32.mrf.mxu0
    %v323 = vadd.f32 %v193, %v322
    %324 = vdwg.mxu0
    %325 = vst [vmem:[#allocation2] sm:$0xff] %v277
    %326 = vst [vmem:[#allocation2 + $0x8] sm:$0xff] %v279
    %327 = vst [vmem:[#allocation2 + $0x10] sm:$0xff] %v281
    %328 = vst [vmem:[#allocation2 + $0x18] sm:$0xff] %v283
    %329 = vst [vmem:[#allocation2 + $0x20] sm:$0xff] %v287
    %330 = vst [vmem:[#allocation2 + $0x28] sm:$0xff] %v289
    %331 = vst [vmem:[#allocation2 + $0x30] sm:$0xff] %v291
    %332 = vst [vmem:[#allocation2 + $0x38] sm:$0xff] %v293
    %333 = vst [vmem:[#allocation2 + $0x40] sm:$0xff] %v297
    %334 = vst [vmem:[#allocation2 + $0x48] sm:$0xff] %v299
    %335 = vst [vmem:[#allocation2 + $0x50] sm:$0xff] %v301
    %336 = vst [vmem:[#allocation2 + $0x58] sm:$0xff] %v303
    %337 = vst [vmem:[#allocation2 + $0x60] sm:$0xff] %v307
    %338 = vst [vmem:[#allocation2 + $0x68] sm:$0xff] %v309
    %339 = vst [vmem:[#allocation2 + $0x70] sm:$0xff] %v311
    %340 = vst [vmem:[#allocation2 + $0x78] sm:$0xff] %v313
    %341 = vst [vmem:[#allocation2 + $0x80] sm:$0xff] %v317
    %342 = vst [vmem:[#allocation2 + $0x88] sm:$0xff] %v319
    %343 = vst [vmem:[#allocation2 + $0x90] sm:$0xff] %v321
    %344 = vst [vmem:[#allocation2 + $0x98] sm:$0xff] %v323
    %v353 = vunpack.c.l.b16 %v22
    %v354 = vunpack.c.h.b16 %v22
    %v355 = vunpack.c.l.b16 %v23
    %v356 = vunpack.c.h.b16 %v23
    %v357 = vunpack.c.l.b16 %v24
    %v358 = vunpack.c.h.b16 %v24
    %v359 = vunpack.c.l.b16 %v25
    %v360 = vunpack.c.h.b16 %v25
    %v361 = vunpack.c.l.b16 %v26
    %v362 = vunpack.c.h.b16 %v26
    %v363 = vunpack.c.l.b16 %v27
    %v364 = vunpack.c.h.b16 %v27
    %v365 = vunpack.c.l.b16 %v28
    %v366 = vunpack.c.h.b16 %v28
    %v367 = vunpack.c.l.b16 %v29
    %v368 = vunpack.c.h.b16 %v29
    %v369 = vpack.c.b16 %v355, %v353
    %v370 = vpack.c.b16 %v356, %v354
    %v371 = vpack.c.b16 %v359, %v357
    %v372 = vpack.c.b16 %v360, %v358
    %v373 = vpack.c.b16 %v363, %v361
    %v374 = vpack.c.b16 %v364, %v362
    %v375 = vpack.c.b16 %v367, %v365
    %v376 = vpack.c.b16 %v368, %v366
    %vm385 = vcmask 523264
    %v387 = vsel %vm385, 0, 0
    %389 = vmatprep.subr.bf16.mxu0 0
    %390 = vmatpush1.bf16.msra.mxu0 0
    %391 = vmatprep.subr.bf16.mxu0 0
    %392 = vmatpush1.bf16.msra.mxu0 0
    %393 = vmatprep.subr.bf16.mxu0 0
    %394 = vmatpush1.bf16.msra.mxu0 0
    %395 = vmatprep.subr.bf16.mxu0 0
    %396 = vmatpush1.bf16.msra.mxu0 0
    %397 = vmatprep.subr.bf16.mxu0 %v376
    %398 = vmatpush1.bf16.msra.mxu0 %v375
    %399 = vmatprep.subr.bf16.mxu0 %v374
    %400 = vmatpush1.bf16.msra.mxu0 %v373
    %401 = vmatprep.subr.bf16.mxu0 %v372
    %402 = vmatpush1.bf16.msra.mxu0 %v371
    %403 = vmatprep.subr.bf16.mxu0 %v370
    %404 = vmatpush1.bf16.msra.mxu0 %v369
    %405 = vmatprep.subr.bf16.mxu0 0
    %406 = vmatpush2.bf16.msra.mxu0 0
    %407 = vmatprep.subr.bf16.mxu0 0
    %408 = vmatpush2.bf16.msra.mxu0 0
    %409 = vmatprep.subr.bf16.mxu0 0
    %410 = vmatpush2.bf16.msra.mxu0 0
    %411 = vmatprep.subr.bf16.mxu0 0
    %412 = vmatpush2.bf16.msra.mxu0 0
    %413 = vmatprep.subr.bf16.mxu0 0
    %414 = vmatpush2.bf16.msra.mxu0 0
    %415 = vmatprep.subr.bf16.mxu0 0
    %416 = vmatpush2.bf16.msra.mxu0 0
    %417 = vmatprep.subr.bf16.mxu0 0
    %418 = vmatpush2.bf16.msra.mxu0 0
    %419 = vmatprep.subr.bf16.mxu0 0
    %420 = vmatpush2.bf16.msra.mxu0 0
    %421 = vmatprep.mubr.bf16.mxu0 0
    %422 = vmatmul.mubr.bf16.gmra.mxu0 %v387
    %v423 = vpop.f32.mrf.mxu0
    %v424 = vadd.f32 0.0, %v423
    %v425 = vpop.f32.mrf.mxu0
    %v426 = vadd.f32 0.0, %v425
    %v427 = vpop.f32.mrf.mxu0
    %v428 = vpop.f32.mrf.mxu0
    %429 = vdwg.mxu0
    %v430 = vld [vmem:[#allocation2] sm:$0xff]
    %v431 = vld [vmem:[#allocation2 + $0x8] sm:$0xff]
    %v432 = vadd.f32 %v430, %v424
    %v433 = vadd.f32 %v431, %v426
    %v434 = vxor.u32 %v432, 2147483648
    %v435 = vxor.u32 %v433, 2147483648
    %v436 = vmul.f32 %v434, 1.442695
    %v437 = vpow.pop %v436
    %v438 = vmul.f32 %v435, 1.442695
    %v439 = vpow.pop %v438
    %v440 = vadd.f32 %v437, 1.0
    %v441 = vadd.f32 %v439, 1.0
    %v442 = vrcp.pop %v440
    %v443 = vmul.f32 1.0, %v442
    %v444 = vrcp.pop %v441
    %v445 = vmul.f32 1.0, %v444
    %v446 = vtanh.pop %v433
    %v447 = vmul.f32 %v443, 0.0
    %v448 = vmul.f32 %v443, %v446
    %450 = vrot.lane.b32.xlu0 %v448, 64
    %v451 = vpop.permute.xlu0 %450
    %v453 = vadd.f32 %v447, %v451
    %v454 = vtanh.pop %v453
    %v455 = vmul.f32 %v445, %v454
    %v456 = vpack.c.bf16 %v455, %v455
    %458 = vrot.lane.b32.xlu0 %v456, 64
    %v459 = vpop.permute.xlu0 %458
    %v461 = vsel %vm385, %v459, 0
    %463 = vmatprep.subr.bf16.mxu0 0
    %464 = vmatpush1.bf16.msra.mxu0 0
    %465 = vmatprep.subr.bf16.mxu0 0
    %466 = vmatpush1.bf16.msra.mxu0 0
    %467 = vmatprep.subr.bf16.mxu0 0
    %468 = vmatpush1.bf16.msra.mxu0 0
    %469 = vmatprep.subr.bf16.mxu0 0
    %470 = vmatpush1.bf16.msra.mxu0 0
    %471 = vmatprep.subr.bf16.mxu0 %v376
    %472 = vmatpush1.bf16.msra.mxu0 %v375
    %473 = vmatprep.subr.bf16.mxu0 %v374
    %474 = vmatpush1.bf16.msra.mxu0 %v373
    %475 = vmatprep.subr.bf16.mxu0 %v372
    %476 = vmatpush1.bf16.msra.mxu0 %v371
    %477 = vmatprep.subr.bf16.mxu0 %v370
    %478 = vmatpush1.bf16.msra.mxu0 %v369
    %479 = vmatprep.subr.bf16.mxu0 0
    %480 = vmatpush2.bf16.msra.mxu0 0
    %481 = vmatprep.subr.bf16.mxu0 0
    %482 = vmatpush2.bf16.msra.mxu0 0
    %483 = vmatprep.subr.bf16.mxu0 0
    %484 = vmatpush2.bf16.msra.mxu0 0
    %485 = vmatprep.subr.bf16.mxu0 0
    %486 = vmatpush2.bf16.msra.mxu0 0
    %487 = vmatprep.subr.bf16.mxu0 0
    %488 = vmatpush2.bf16.msra.mxu0 0
    %489 = vmatprep.subr.bf16.mxu0 0
    %490 = vmatpush2.bf16.msra.mxu0 0
    %491 = vmatprep.subr.bf16.mxu0 0
    %492 = vmatpush2.bf16.msra.mxu0 0
    %493 = vmatprep.subr.bf16.mxu0 0
    %494 = vmatpush2.bf16.msra.mxu0 0
    %495 = vmatprep.mubr.bf16.mxu0 0
    %496 = vmatmul.mubr.bf16.gmra.mxu0 %v461
    %v497 = vpop.f32.mrf.mxu0
    %v498 = vadd.f32 0.0, %v497
    %v499 = vpop.f32.mrf.mxu0
    %v500 = vadd.f32 0.0, %v499
    %v501 = vpop.f32.mrf.mxu0
    %v502 = vpop.f32.mrf.mxu0
    %503 = vdwg.mxu0
    %v504 = vld [vmem:[#allocation2 + $0x10] sm:$0xff]
    %v505 = vld [vmem:[#allocation2 + $0x18] sm:$0xff]
    %v506 = vadd.f32 %v504, %v498
    %v507 = vadd.f32 %v505, %v500
    %v508 = vxor.u32 %v506, 2147483648
    %v509 = vxor.u32 %v507, 2147483648
    %v510 = vmul.f32 %v508, 1.442695
    %v511 = vpow.pop %v510
    %v512 = vmul.f32 %v509, 1.442695
    %v513 = vpow.pop %v512
    %v514 = vadd.f32 %v511, 1.0
    %v515 = vadd.f32 %v513, 1.0
    %v516 = vrcp.pop %v514
    %v517 = vmul.f32 1.0, %v516
    %v518 = vrcp.pop %v515
    %v519 = vmul.f32 1.0, %v518
    %v520 = vtanh.pop %v507
    %v521 = vmul.f32 %v517, %v453
    %v522 = vmul.f32 %v517, %v520
    %524 = vrot.lane.b32.xlu0 %v522, 64
    %v525 = vpop.permute.xlu0 %524
    %v527 = vadd.f32 %v521, %v525
    %v528 = vtanh.pop %v527
    %v529 = vmul.f32 %v519, %v528
    %v530 = vpack.c.bf16 %v529, %v529
    %532 = vrot.lane.b32.xlu0 %v530, 64
    %v533 = vpop.permute.xlu0 %532
    %v535 = vsel %vm385, %v533, 0
    %537 = vmatprep.subr.bf16.mxu0 0
    %538 = vmatpush1.bf16.msra.mxu0 0
    %539 = vmatprep.subr.bf16.mxu0 0
    %540 = vmatpush1.bf16.msra.mxu0 0
    %541 = vmatprep.subr.bf16.mxu0 0
    %542 = vmatpush1.bf16.msra.mxu0 0
    %543 = vmatprep.subr.bf16.mxu0 0
    %544 = vmatpush1.bf16.msra.mxu0 0
    %545 = vmatprep.subr.bf16.mxu0 %v376
    %546 = vmatpush1.bf16.msra.mxu0 %v375
    %547 = vmatprep.subr.bf16.mxu0 %v374
    %548 = vmatpush1.bf16.msra.mxu0 %v373
    %549 = vmatprep.subr.bf16.mxu0 %v372
    %550 = vmatpush1.bf16.msra.mxu0 %v371
    %551 = vmatprep.subr.bf16.mxu0 %v370
    %552 = vmatpush1.bf16.msra.mxu0 %v369
    %553 = vmatprep.subr.bf16.mxu0 0
    %554 = vmatpush2.bf16.msra.mxu0 0
    %555 = vmatprep.subr.bf16.mxu0 0
    %556 = vmatpush2.bf16.msra.mxu0 0
    %557 = vmatprep.subr.bf16.mxu0 0
    %558 = vmatpush2.bf16.msra.mxu0 0
    %559 = vmatprep.subr.bf16.mxu0 0
    %560 = vmatpush2.bf16.msra.mxu0 0
    %561 = vmatprep.subr.bf16.mxu0 0
    %562 = vmatpush2.bf16.msra.mxu0 0
    %563 = vmatprep.subr.bf16.mxu0 0
    %564 = vmatpush2.bf16.msra.mxu0 0
    %565 = vmatprep.subr.bf16.mxu0 0
    %566 = vmatpush2.bf16.msra.mxu0 0
    %567 = vmatprep.subr.bf16.mxu0 0
    %568 = vmatpush2.bf16.msra.mxu0 0
    %569 = vmatprep.mubr.bf16.mxu0 0
    %570 = vmatmul.mubr.bf16.gmra.mxu0 %v535
    %v571 = vpop.f32.mrf.mxu0
    %v572 = vadd.f32 0.0, %v571
    %v573 = vpop.f32.mrf.mxu0
    %v574 = vadd.f32 0.0, %v573
    %v575 = vpop.f32.mrf.mxu0
    %v576 = vpop.f32.mrf.mxu0
    %577 = vdwg.mxu0
    %v578 = vld [vmem:[#allocation2 + $0x20] sm:$0xff]
    %v579 = vld [vmem:[#allocation2 + $0x28] sm:$0xff]
    %v580 = vadd.f32 %v578, %v572
    %v581 = vadd.f32 %v579, %v574
    %v582 = vxor.u32 %v580, 2147483648
    %v583 = vxor.u32 %v581, 2147483648
    %v584 = vmul.f32 %v582, 1.442695
    %v585 = vpow.pop %v584
    %v586 = vmul.f32 %v583, 1.442695
    %v587 = vpow.pop %v586
    %v588 = vadd.f32 %v585, 1.0
    %v589 = vadd.f32 %v587, 1.0
    %v590 = vrcp.pop %v588
    %v591 = vmul.f32 1.0, %v590
    %v592 = vrcp.pop %v589
    %v593 = vmul.f32 1.0, %v592
    %v594 = vtanh.pop %v581
    %v595 = vmul.f32 %v591, %v527
    %v596 = vmul.f32 %v591, %v594
    %598 = vrot.lane.b32.xlu0 %v596, 64
    %v599 = vpop.permute.xlu0 %598
    %v601 = vadd.f32 %v595, %v599
    %v602 = vtanh.pop %v601
    %v603 = vmul.f32 %v593, %v602
    %v604 = vpack.c.bf16 %v603, %v603
    %606 = vrot.lane.b32.xlu0 %v604, 64
    %v607 = vpop.permute.xlu0 %606
    %v609 = vsel %vm385, %v607, 0
    %611 = vmatprep.subr.bf16.mxu0 0
    %612 = vmatpush1.bf16.msra.mxu0 0
    %613 = vmatprep.subr.bf16.mxu0 0
    %614 = vmatpush1.bf16.msra.mxu0 0
    %615 = vmatprep.subr.bf16.mxu0 0
    %616 = vmatpush1.bf16.msra.mxu0 0
    %617 = vmatprep.subr.bf16.mxu0 0
    %618 = vmatpush1.bf16.msra.mxu0 0
    %619 = vmatprep.subr.bf16.mxu0 %v376
    %620 = vmatpush1.bf16.msra.mxu0 %v375
    %621 = vmatprep.subr.bf16.mxu0 %v374
    %622 = vmatpush1.bf16.msra.mxu0 %v373
    %623 = vmatprep.subr.bf16.mxu0 %v372
    %624 = vmatpush1.bf16.msra.mxu0 %v371
    %625 = vmatprep.subr.bf16.mxu0 %v370
    %626 = vmatpush1.bf16.msra.mxu0 %v369
    %627 = vmatprep.subr.bf16.mxu0 0
    %628 = vmatpush2.bf16.msra.mxu0 0
    %629 = vmatprep.subr.bf16.mxu0 0
    %630 = vmatpush2.bf16.msra.mxu0 0
    %631 = vmatprep.subr.bf16.mxu0 0
    %632 = vmatpush2.bf16.msra.mxu0 0
    %633 = vmatprep.subr.bf16.mxu0 0
    %634 = vmatpush2.bf16.msra.mxu0 0
    %635 = vmatprep.subr.bf16.mxu0 0
    %636 = vmatpush2.bf16.msra.mxu0 0
    %637 = vmatprep.subr.bf16.mxu0 0
    %638 = vmatpush2.bf16.msra.mxu0 0
    %639 = vmatprep.subr.bf16.mxu0 0
    %640 = vmatpush2.bf16.msra.mxu0 0
    %641 = vmatprep.subr.bf16.mxu0 0
    %642 = vmatpush2.bf16.msra.mxu0 0
    %643 = vmatprep.mubr.bf16.mxu0 0
    %644 = vmatmul.mubr.bf16.gmra.mxu0 %v609
    %v645 = vpop.f32.mrf.mxu0
    %v646 = vadd.f32 0.0, %v645
    %v647 = vpop.f32.mrf.mxu0
    %v648 = vadd.f32 0.0, %v647
    %v649 = vpop.f32.mrf.mxu0
    %v650 = vpop.f32.mrf.mxu0
    %651 = vdwg.mxu0
    %v652 = vld [vmem:[#allocation2 + $0x30] sm:$0xff]
    %v653 = vld [vmem:[#allocation2 + $0x38] sm:$0xff]
    %v654 = vadd.f32 %v652, %v646
    %v655 = vadd.f32 %v653, %v648
    %v656 = vxor.u32 %v654, 2147483648
    %v657 = vxor.u32 %v655, 2147483648
    %v658 = vmul.f32 %v656, 1.442695
    %v659 = vpow.pop %v658
    %v660 = vmul.f32 %v657, 1.442695
    %v661 = vpow.pop %v660
    %v662 = vadd.f32 %v659, 1.0
    %v663 = vadd.f32 %v661, 1.0
    %v664 = vrcp.pop %v662
    %v665 = vmul.f32 1.0, %v664
    %v666 = vrcp.pop %v663
    %v667 = vmul.f32 1.0, %v666
    %v668 = vtanh.pop %v655
    %v669 = vmul.f32 %v665, %v601
    %v670 = vmul.f32 %v665, %v668
    %672 = vrot.lane.b32.xlu0 %v670, 64
    %v673 = vpop.permute.xlu0 %672
    %v675 = vadd.f32 %v669, %v673
    %v676 = vtanh.pop %v675
    %v677 = vmul.f32 %v667, %v676
    %v678 = vpack.c.bf16 %v677, %v677
    %680 = vrot.lane.b32.xlu0 %v678, 64
    %v681 = vpop.permute.xlu0 %680
    %v683 = vsel %vm385, %v681, 0
    %685 = vmatprep.subr.bf16.mxu0 0
    %686 = vmatpush1.bf16.msra.mxu0 0
    %687 = vmatprep.subr.bf16.mxu0 0
    %688 = vmatpush1.bf16.msra.mxu0 0
    %689 = vmatprep.subr.bf16.mxu0 0
    %690 = vmatpush1.bf16.msra.mxu0 0
    %691 = vmatprep.subr.bf16.mxu0 0
    %692 = vmatpush1.bf16.msra.mxu0 0
    %693 = vmatprep.subr.bf16.mxu0 %v376
    %694 = vmatpush1.bf16.msra.mxu0 %v375
    %695 = vmatprep.subr.bf16.mxu0 %v374
    %696 = vmatpush1.bf16.msra.mxu0 %v373
    %697 = vmatprep.subr.bf16.mxu0 %v372
    %698 = vmatpush1.bf16.msra.mxu0 %v371
    %699 = vmatprep.subr.bf16.mxu0 %v370
    %700 = vmatpush1.bf16.msra.mxu0 %v369
    %701 = vmatprep.subr.bf16.mxu0 0
    %702 = vmatpush2.bf16.msra.mxu0 0
    %703 = vmatprep.subr.bf16.mxu0 0
    %704 = vmatpush2.bf16.msra.mxu0 0
    %705 = vmatprep.subr.bf16.mxu0 0
    %706 = vmatpush2.bf16.msra.mxu0 0
    %707 = vmatprep.subr.bf16.mxu0 0
    %708 = vmatpush2.bf16.msra.mxu0 0
    %709 = vmatprep.subr.bf16.mxu0 0
    %710 = vmatpush2.bf16.msra.mxu0 0
    %711 = vmatprep.subr.bf16.mxu0 0
    %712 = vmatpush2.bf16.msra.mxu0 0
    %713 = vmatprep.subr.bf16.mxu0 0
    %714 = vmatpush2.bf16.msra.mxu0 0
    %715 = vmatprep.subr.bf16.mxu0 0
    %716 = vmatpush2.bf16.msra.mxu0 0
    %717 = vmatprep.mubr.bf16.mxu0 0
    %718 = vmatmul.mubr.bf16.gmra.mxu0 %v683
    %v719 = vpop.f32.mrf.mxu0
    %v720 = vadd.f32 0.0, %v719
    %v721 = vpop.f32.mrf.mxu0
    %v722 = vadd.f32 0.0, %v721
    %v723 = vpop.f32.mrf.mxu0
    %v724 = vpop.f32.mrf.mxu0
    %725 = vdwg.mxu0
    %v726 = vld [vmem:[#allocation2 + $0x40] sm:$0xff]
    %v727 = vld [vmem:[#allocation2 + $0x48] sm:$0xff]
    %v728 = vadd.f32 %v726, %v720
    %v729 = vadd.f32 %v727, %v722
    %v730 = vxor.u32 %v728, 2147483648
    %v731 = vxor.u32 %v729, 2147483648
    %v732 = vmul.f32 %v730, 1.442695
    %v733 = vpow.pop %v732
    %v734 = vmul.f32 %v731, 1.442695
    %v735 = vpow.pop %v734
    %v736 = vadd.f32 %v733, 1.0
    %v737 = vadd.f32 %v735, 1.0
    %v738 = vrcp.pop %v736
    %v739 = vmul.f32 1.0, %v738
    %v740 = vrcp.pop %v737
    %v741 = vmul.f32 1.0, %v740
    %v742 = vtanh.pop %v729
    %v743 = vmul.f32 %v739, %v675
    %v744 = vmul.f32 %v739, %v742
    %746 = vrot.lane.b32.xlu0 %v744, 64
    %v747 = vpop.permute.xlu0 %746
    %v749 = vadd.f32 %v743, %v747
    %v750 = vtanh.pop %v749
    %v751 = vmul.f32 %v741, %v750
    %v752 = vpack.c.bf16 %v751, %v751
    %754 = vrot.lane.b32.xlu0 %v752, 64
    %v755 = vpop.permute.xlu0 %754
    %v757 = vsel %vm385, %v755, 0
    %759 = vmatprep.subr.bf16.mxu0 0
    %760 = vmatpush1.bf16.msra.mxu0 0
    %761 = vmatprep.subr.bf16.mxu0 0
    %762 = vmatpush1.bf16.msra.mxu0 0
    %763 = vmatprep.subr.bf16.mxu0 0
    %764 = vmatpush1.bf16.msra.mxu0 0
    %765 = vmatprep.subr.bf16.mxu0 0
    %766 = vmatpush1.bf16.msra.mxu0 0
    %767 = vmatprep.subr.bf16.mxu0 %v376
    %768 = vmatpush1.bf16.msra.mxu0 %v375
    %769 = vmatprep.subr.bf16.mxu0 %v374
    %770 = vmatpush1.bf16.msra.mxu0 %v373
    %771 = vmatprep.subr.bf16.mxu0 %v372
    %772 = vmatpush1.bf16.msra.mxu0 %v371
    %773 = vmatprep.subr.bf16.mxu0 %v370
    %774 = vmatpush1.bf16.msra.mxu0 %v369
    %775 = vmatprep.subr.bf16.mxu0 0
    %776 = vmatpush2.bf16.msra.mxu0 0
    %777 = vmatprep.subr.bf16.mxu0 0
    %778 = vmatpush2.bf16.msra.mxu0 0
    %779 = vmatprep.subr.bf16.mxu0 0
    %780 = vmatpush2.bf16.msra.mxu0 0
    %781 = vmatprep.subr.bf16.mxu0 0
    %782 = vmatpush2.bf16.msra.mxu0 0
    %783 = vmatprep.subr.bf16.mxu0 0
    %784 = vmatpush2.bf16.msra.mxu0 0
    %785 = vmatprep.subr.bf16.mxu0 0
    %786 = vmatpush2.bf16.msra.mxu0 0
    %787 = vmatprep.subr.bf16.mxu0 0
    %788 = vmatpush2.bf16.msra.mxu0 0
    %789 = vmatprep.subr.bf16.mxu0 0
    %790 = vmatpush2.bf16.msra.mxu0 0
    %791 = vmatprep.mubr.bf16.mxu0 0
    %792 = vmatmul.mubr.bf16.gmra.mxu0 %v757
    %v793 = vpop.f32.mrf.mxu0
    %v794 = vadd.f32 0.0, %v793
    %v795 = vpop.f32.mrf.mxu0
    %v796 = vadd.f32 0.0, %v795
    %v797 = vpop.f32.mrf.mxu0
    %v798 = vpop.f32.mrf.mxu0
    %799 = vdwg.mxu0
    %v800 = vld [vmem:[#allocation2 + $0x50] sm:$0xff]
    %v801 = vld [vmem:[#allocation2 + $0x58] sm:$0xff]
    %v802 = vadd.f32 %v800, %v794
    %v803 = vadd.f32 %v801, %v796
    %v804 = vxor.u32 %v802, 2147483648
    %v805 = vxor.u32 %v803, 2147483648
    %v806 = vmul.f32 %v804, 1.442695
    %v807 = vpow.pop %v806
    %v808 = vmul.f32 %v805, 1.442695
    %v809 = vpow.pop %v808
    %v810 = vadd.f32 %v807, 1.0
    %v811 = vadd.f32 %v809, 1.0
    %v812 = vrcp.pop %v810
    %v813 = vmul.f32 1.0, %v812
    %v814 = vrcp.pop %v811
    %v815 = vmul.f32 1.0, %v814
    %v816 = vtanh.pop %v803
    %v817 = vmul.f32 %v813, %v749
    %v818 = vmul.f32 %v813, %v816
    %820 = vrot.lane.b32.xlu0 %v818, 64
    %v821 = vpop.permute.xlu0 %820
    %v823 = vadd.f32 %v817, %v821
    %v824 = vtanh.pop %v823
    %v825 = vmul.f32 %v815, %v824
    %v826 = vpack.c.bf16 %v825, %v825
    %828 = vrot.lane.b32.xlu0 %v826, 64
    %v829 = vpop.permute.xlu0 %828
    %v831 = vsel %vm385, %v829, 0
    %833 = vmatprep.subr.bf16.mxu0 0
    %834 = vmatpush1.bf16.msra.mxu0 0
    %835 = vmatprep.subr.bf16.mxu0 0
    %836 = vmatpush1.bf16.msra.mxu0 0
    %837 = vmatprep.subr.bf16.mxu0 0
    %838 = vmatpush1.bf16.msra.mxu0 0
    %839 = vmatprep.subr.bf16.mxu0 0
    %840 = vmatpush1.bf16.msra.mxu0 0
    %841 = vmatprep.subr.bf16.mxu0 %v376
    %842 = vmatpush1.bf16.msra.mxu0 %v375
    %843 = vmatprep.subr.bf16.mxu0 %v374
    %844 = vmatpush1.bf16.msra.mxu0 %v373
    %845 = vmatprep.subr.bf16.mxu0 %v372
    %846 = vmatpush1.bf16.msra.mxu0 %v371
    %847 = vmatprep.subr.bf16.mxu0 %v370
    %848 = vmatpush1.bf16.msra.mxu0 %v369
    %849 = vmatprep.subr.bf16.mxu0 0
    %850 = vmatpush2.bf16.msra.mxu0 0
    %851 = vmatprep.subr.bf16.mxu0 0
    %852 = vmatpush2.bf16.msra.mxu0 0
    %853 = vmatprep.subr.bf16.mxu0 0
    %854 = vmatpush2.bf16.msra.mxu0 0
    %855 = vmatprep.subr.bf16.mxu0 0
    %856 = vmatpush2.bf16.msra.mxu0 0
    %857 = vmatprep.subr.bf16.mxu0 0
    %858 = vmatpush2.bf16.msra.mxu0 0
    %859 = vmatprep.subr.bf16.mxu0 0
    %860 = vmatpush2.bf16.msra.mxu0 0
    %861 = vmatprep.subr.bf16.mxu0 0
    %862 = vmatpush2.bf16.msra.mxu0 0
    %863 = vmatprep.subr.bf16.mxu0 0
    %864 = vmatpush2.bf16.msra.mxu0 0
    %865 = vmatprep.mubr.bf16.mxu0 0
    %866 = vmatmul.mubr.bf16.gmra.mxu0 %v831
    %v867 = vpop.f32.mrf.mxu0
    %v868 = vadd.f32 0.0, %v867
    %v869 = vpop.f32.mrf.mxu0
    %v870 = vadd.f32 0.0, %v869
    %v871 = vpop.f32.mrf.mxu0
    %v872 = vpop.f32.mrf.mxu0
    %873 = vdwg.mxu0
    %v874 = vld [vmem:[#allocation2 + $0x60] sm:$0xff]
    %v875 = vld [vmem:[#allocation2 + $0x68] sm:$0xff]
    %v876 = vadd.f32 %v874, %v868
    %v877 = vadd.f32 %v875, %v870
    %v878 = vxor.u32 %v876, 2147483648
    %v879 = vxor.u32 %v877, 2147483648
    %v880 = vmul.f32 %v878, 1.442695
    %v881 = vpow.pop %v880
    %v882 = vmul.f32 %v879, 1.442695
    %v883 = vpow.pop %v882
    %v884 = vadd.f32 %v881, 1.0
    %v885 = vadd.f32 %v883, 1.0
    %v886 = vrcp.pop %v884
    %v887 = vmul.f32 1.0, %v886
    %v888 = vrcp.pop %v885
    %v889 = vmul.f32 1.0, %v888
    %v890 = vtanh.pop %v877
    %v891 = vmul.f32 %v887, %v823
    %v892 = vmul.f32 %v887, %v890
    %894 = vrot.lane.b32.xlu0 %v892, 64
    %v895 = vpop.permute.xlu0 %894
    %v897 = vadd.f32 %v891, %v895
    %v898 = vtanh.pop %v897
    %v899 = vmul.f32 %v889, %v898
    %v900 = vpack.c.bf16 %v899, %v899
    %902 = vrot.lane.b32.xlu0 %v900, 64
    %v903 = vpop.permute.xlu0 %902
    %v905 = vsel %vm385, %v903, 0
    %907 = vmatprep.subr.bf16.mxu0 0
    %908 = vmatpush1.bf16.msra.mxu0 0
    %909 = vmatprep.subr.bf16.mxu0 0
    %910 = vmatpush1.bf16.msra.mxu0 0
    %911 = vmatprep.subr.bf16.mxu0 0
    %912 = vmatpush1.bf16.msra.mxu0 0
    %913 = vmatprep.subr.bf16.mxu0 0
    %914 = vmatpush1.bf16.msra.mxu0 0
    %915 = vmatprep.subr.bf16.mxu0 %v376
    %916 = vmatpush1.bf16.msra.mxu0 %v375
    %917 = vmatprep.subr.bf16.mxu0 %v374
    %918 = vmatpush1.bf16.msra.mxu0 %v373
    %919 = vmatprep.subr.bf16.mxu0 %v372
    %920 = vmatpush1.bf16.msra.mxu0 %v371
    %921 = vmatprep.subr.bf16.mxu0 %v370
    %922 = vmatpush1.bf16.msra.mxu0 %v369
    %923 = vmatprep.subr.bf16.mxu0 0
    %924 = vmatpush2.bf16.msra.mxu0 0
    %925 = vmatprep.subr.bf16.mxu0 0
    %926 = vmatpush2.bf16.msra.mxu0 0
    %927 = vmatprep.subr.bf16.mxu0 0
    %928 = vmatpush2.bf16.msra.mxu0 0
    %929 = vmatprep.subr.bf16.mxu0 0
    %930 = vmatpush2.bf16.msra.mxu0 0
    %931 = vmatprep.subr.bf16.mxu0 0
    %932 = vmatpush2.bf16.msra.mxu0 0
    %933 = vmatprep.subr.bf16.mxu0 0
    %934 = vmatpush2.bf16.msra.mxu0 0
    %935 = vmatprep.subr.bf16.mxu0 0
    %936 = vmatpush2.bf16.msra.mxu0 0
    %937 = vmatprep.subr.bf16.mxu0 0
    %938 = vmatpush2.bf16.msra.mxu0 0
    %939 = vmatprep.mubr.bf16.mxu0 0
    %940 = vmatmul.mubr.bf16.gmra.mxu0 %v905
    %v941 = vpop.f32.mrf.mxu0
    %v942 = vadd.f32 0.0, %v941
    %v943 = vpop.f32.mrf.mxu0
    %v944 = vadd.f32 0.0, %v943
    %v945 = vpop.f32.mrf.mxu0
    %v946 = vpop.f32.mrf.mxu0
    %947 = vdwg.mxu0
    %v948 = vld [vmem:[#allocation2 + $0x70] sm:$0xff]
    %v949 = vld [vmem:[#allocation2 + $0x78] sm:$0xff]
    %v950 = vadd.f32 %v948, %v942
    %v951 = vadd.f32 %v949, %v944
    %v952 = vxor.u32 %v950, 2147483648
    %v953 = vxor.u32 %v951, 2147483648
    %v954 = vmul.f32 %v952, 1.442695
    %v955 = vpow.pop %v954
    %v956 = vmul.f32 %v953, 1.442695
    %v957 = vpow.pop %v956
    %v958 = vadd.f32 %v955, 1.0
    %v959 = vadd.f32 %v957, 1.0
    %v960 = vrcp.pop %v958
    %v961 = vmul.f32 1.0, %v960
    %v962 = vrcp.pop %v959
    %v963 = vmul.f32 1.0, %v962
    %v964 = vtanh.pop %v951
    %v965 = vmul.f32 %v961, %v897
    %v966 = vmul.f32 %v961, %v964
    %968 = vrot.lane.b32.xlu0 %v966, 64
    %v969 = vpop.permute.xlu0 %968
    %v971 = vadd.f32 %v965, %v969
    %v972 = vtanh.pop %v971
    %v973 = vmul.f32 %v963, %v972
    %v974 = vpack.c.bf16 %v973, %v973
    %976 = vrot.lane.b32.xlu0 %v974, 64
    %v977 = vpop.permute.xlu0 %976
    %v979 = vsel %vm385, %v977, 0
    %981 = vmatprep.subr.bf16.mxu0 0
    %982 = vmatpush1.bf16.msra.mxu0 0
    %983 = vmatprep.subr.bf16.mxu0 0
    %984 = vmatpush1.bf16.msra.mxu0 0
    %985 = vmatprep.subr.bf16.mxu0 0
    %986 = vmatpush1.bf16.msra.mxu0 0
    %987 = vmatprep.subr.bf16.mxu0 0
    %988 = vmatpush1.bf16.msra.mxu0 0
    %989 = vmatprep.subr.bf16.mxu0 %v376
    %990 = vmatpush1.bf16.msra.mxu0 %v375
    %991 = vmatprep.subr.bf16.mxu0 %v374
    %992 = vmatpush1.bf16.msra.mxu0 %v373
    %993 = vmatprep.subr.bf16.mxu0 %v372
    %994 = vmatpush1.bf16.msra.mxu0 %v371
    %995 = vmatprep.subr.bf16.mxu0 %v370
    %996 = vmatpush1.bf16.msra.mxu0 %v369
    %997 = vmatprep.subr.bf16.mxu0 0
    %998 = vmatpush2.bf16.msra.mxu0 0
    %999 = vmatprep.subr.bf16.mxu0 0
    %1000 = vmatpush2.bf16.msra.mxu0 0
    %1001 = vmatprep.subr.bf16.mxu0 0
    %1002 = vmatpush2.bf16.msra.mxu0 0
    %1003 = vmatprep.subr.bf16.mxu0 0
    %1004 = vmatpush2.bf16.msra.mxu0 0
    %1005 = vmatprep.subr.bf16.mxu0 0
    %1006 = vmatpush2.bf16.msra.mxu0 0
    %1007 = vmatprep.subr.bf16.mxu0 0
    %1008 = vmatpush2.bf16.msra.mxu0 0
    %1009 = vmatprep.subr.bf16.mxu0 0
    %1010 = vmatpush2.bf16.msra.mxu0 0
    %1011 = vmatprep.subr.bf16.mxu0 0
    %1012 = vmatpush2.bf16.msra.mxu0 0
    %1013 = vmatprep.mubr.bf16.mxu0 0
    %1014 = vmatmul.mubr.bf16.gmra.mxu0 %v979
    %v1015 = vpop.f32.mrf.mxu0
    %v1016 = vadd.f32 0.0, %v1015
    %v1017 = vpop.f32.mrf.mxu0
    %v1018 = vadd.f32 0.0, %v1017
    %v1019 = vpop.f32.mrf.mxu0
    %v1020 = vpop.f32.mrf.mxu0
    %1021 = vdwg.mxu0
    %v1022 = vld [vmem:[#allocation2 + $0x80] sm:$0xff]
    %v1023 = vld [vmem:[#allocation2 + $0x88] sm:$0xff]
    %v1024 = vadd.f32 %v1022, %v1016
    %v1025 = vadd.f32 %v1023, %v1018
    %v1026 = vxor.u32 %v1024, 2147483648
    %v1027 = vxor.u32 %v1025, 2147483648
    %v1028 = vmul.f32 %v1026, 1.442695
    %v1029 = vpow.pop %v1028
    %v1030 = vmul.f32 %v1027, 1.442695
    %v1031 = vpow.pop %v1030
    %v1032 = vadd.f32 %v1029, 1.0
    %v1033 = vadd.f32 %v1031, 1.0
    %v1034 = vrcp.pop %v1032
    %v1035 = vmul.f32 1.0, %v1034
    %v1036 = vrcp.pop %v1033
    %v1037 = vmul.f32 1.0, %v1036
    %v1038 = vtanh.pop %v1025
    %v1039 = vmul.f32 %v1035, %v971
    %v1040 = vmul.f32 %v1035, %v1038
    %1042 = vrot.lane.b32.xlu0 %v1040, 64
    %v1043 = vpop.permute.xlu0 %1042
    %v1045 = vadd.f32 %v1039, %v1043
    %v1046 = vtanh.pop %v1045
    %v1047 = vmul.f32 %v1037, %v1046
    %v1048 = vpack.c.bf16 %v1047, %v1047
    %1050 = vrot.lane.b32.xlu0 %v1048, 64
    %v1051 = vpop.permute.xlu0 %1050
    %v1053 = vsel %vm385, %v1051, 0
    %1055 = vmatprep.subr.bf16.mxu0 0
    %1056 = vmatpush1.bf16.msra.mxu0 0
    %1057 = vmatprep.subr.bf16.mxu0 0
    %1058 = vmatpush1.bf16.msra.mxu0 0
    %1059 = vmatprep.subr.bf16.mxu0 0
    %1060 = vmatpush1.bf16.msra.mxu0 0
    %1061 = vmatprep.subr.bf16.mxu0 0
    %1062 = vmatpush1.bf16.msra.mxu0 0
    %1063 = vmatprep.subr.bf16.mxu0 %v376
    %1064 = vmatpush1.bf16.msra.mxu0 %v375
    %1065 = vmatprep.subr.bf16.mxu0 %v374
    %1066 = vmatpush1.bf16.msra.mxu0 %v373
    %1067 = vmatprep.subr.bf16.mxu0 %v372
    %1068 = vmatpush1.bf16.msra.mxu0 %v371
    %1069 = vmatprep.subr.bf16.mxu0 %v370
    %1070 = vmatpush1.bf16.msra.mxu0 %v369
    %1071 = vmatprep.subr.bf16.mxu0 0
    %1072 = vmatpush2.bf16.msra.mxu0 0
    %1073 = vmatprep.subr.bf16.mxu0 0
    %1074 = vmatpush2.bf16.msra.mxu0 0
    %1075 = vmatprep.subr.bf16.mxu0 0
    %1076 = vmatpush2.bf16.msra.mxu0 0
    %1077 = vmatprep.subr.bf16.mxu0 0
    %1078 = vmatpush2.bf16.msra.mxu0 0
    %1079 = vmatprep.subr.bf16.mxu0 0
    %1080 = vmatpush2.bf16.msra.mxu0 0
    %1081 = vmatprep.subr.bf16.mxu0 0
    %1082 = vmatpush2.bf16.msra.mxu0 0
    %1083 = vmatprep.subr.bf16.mxu0 0
    %1084 = vmatpush2.bf16.msra.mxu0 0
    %1085 = vmatprep.subr.bf16.mxu0 0
    %1086 = vmatpush2.bf16.msra.mxu0 0
    %1087 = vmatprep.mubr.bf16.mxu0 0
    %1088 = vmatmul.mubr.bf16.gmra.mxu0 %v1053
    %v1089 = vpop.f32.mrf.mxu0
    %v1090 = vadd.f32 0.0, %v1089
    %v1091 = vpop.f32.mrf.mxu0
    %v1092 = vadd.f32 0.0, %v1091
    %v1093 = vpop.f32.mrf.mxu0
    %v1094 = vpop.f32.mrf.mxu0
    %1095 = vdwg.mxu0
    %v1096 = vld [vmem:[#allocation2 + $0x90] sm:$0xff]
    %v1097 = vld [vmem:[#allocation2 + $0x98] sm:$0xff]
    %v1098 = vadd.f32 %v1096, %v1090
    %v1099 = vadd.f32 %v1097, %v1092
    %v1100 = vxor.u32 %v1098, 2147483648
    %v1101 = vxor.u32 %v1099, 2147483648
    %v1102 = vmul.f32 %v1100, 1.442695
    %v1103 = vpow.pop %v1102
    %v1104 = vmul.f32 %v1101, 1.442695
    %v1105 = vpow.pop %v1104
    %v1106 = vadd.f32 %v1103, 1.0
    %v1107 = vadd.f32 %v1105, 1.0
    %v1108 = vrcp.pop %v1106
    %v1109 = vmul.f32 1.0, %v1108
    %v1110 = vrcp.pop %v1107
    %v1111 = vmul.f32 1.0, %v1110
    %v1112 = vtanh.pop %v1099
    %v1113 = vmul.f32 %v1109, %v1045
    %v1114 = vmul.f32 %v1109, %v1112
    %1116 = vrot.lane.b32.xlu0 %v1114, 64
    %v1117 = vpop.permute.xlu0 %1116
    %v1119 = vadd.f32 %v1113, %v1117
    %v1120 = vtanh.pop %v1119
    %v1121 = vmul.f32 %v1111, %v1120
    %v1122 = vpack.c.bf16 %v1121, %v1121
    %v1124 = vlaneseq
    %v1125 = vshrl.u32 %v1124, 7
    %v1126 = vsub.s32 0, %v1125
    %v1127 = vrot.slane %v64, %v1126
    %v1128 = vlaneseq
    %v1129 = vshrl.u32 %v1128, 7
    %v1130 = vsub.s32 1, %v1129
    %v1131 = vrot.slane %v64, %v1130
    %1135 = vrot.lane.b32.xlu0 %v1122, 64
    %v1136 = vpop.permute.xlu0 %1135
    %v1145 = vunpack.c.l.b16 %v30
    %v1146 = vunpack.c.h.b16 %v30
    %v1147 = vunpack.c.l.b16 %v31
    %v1148 = vunpack.c.h.b16 %v31
    %v1149 = vunpack.c.l.b16 %v32
    %v1150 = vunpack.c.h.b16 %v32
    %v1151 = vunpack.c.l.b16 %v33
    %v1152 = vunpack.c.h.b16 %v33
    %v1153 = vunpack.c.l.b16 %v34
    %v1154 = vunpack.c.h.b16 %v34
    %v1155 = vunpack.c.l.b16 %v35
    %v1156 = vunpack.c.h.b16 %v35
    %v1157 = vunpack.c.l.b16 %v36
    %v1158 = vunpack.c.h.b16 %v36
    %v1159 = vunpack.c.l.b16 %v37
    %v1160 = vunpack.c.h.b16 %v37
    %v1161 = vpack.c.b16 %v1147, %v1145
    %v1162 = vpack.c.b16 %v1148, %v1146
    %v1163 = vpack.c.b16 %v1151, %v1149
    %v1164 = vpack.c.b16 %v1152, %v1150
    %v1165 = vpack.c.b16 %v1155, %v1153
    %v1166 = vpack.c.b16 %v1156, %v1154
    %v1167 = vpack.c.b16 %v1159, %v1157
    %v1168 = vpack.c.b16 %v1160, %v1158
    %v1178 = vsel %vm385, %v1136, 0
    %1180 = vmatprep.subr.bf16.mxu0 0
    %1181 = vmatpush1.bf16.msra.mxu0 0
    %1182 = vmatprep.subr.bf16.mxu0 0
    %1183 = vmatpush1.bf16.msra.mxu0 0
    %1184 = vmatprep.subr.bf16.mxu0 0
    %1185 = vmatpush1.bf16.msra.mxu0 0
    %1186 = vmatprep.subr.bf16.mxu0 0
    %1187 = vmatpush1.bf16.msra.mxu0 0
    %1188 = vmatprep.subr.bf16.mxu0 %v1168
    %1189 = vmatpush1.bf16.msra.mxu0 %v1167
    %1190 = vmatprep.subr.bf16.mxu0 %v1166
    %1191 = vmatpush1.bf16.msra.mxu0 %v1165
    %1192 = vmatprep.subr.bf16.mxu0 %v1164
    %1193 = vmatpush1.bf16.msra.mxu0 %v1163
    %1194 = vmatprep.subr.bf16.mxu0 %v1162
    %1195 = vmatpush1.bf16.msra.mxu0 %v1161
    %1196 = vmatprep.subr.bf16.mxu0 0
    %1197 = vmatpush2.bf16.msra.mxu0 0
    %1198 = vmatprep.subr.bf16.mxu0 0
    %1199 = vmatpush2.bf16.msra.mxu0 0
    %1200 = vmatprep.subr.bf16.mxu0 0
    %1201 = vmatpush2.bf16.msra.mxu0 0
    %1202 = vmatprep.subr.bf16.mxu0 0
    %1203 = vmatpush2.bf16.msra.mxu0 0
    %1204 = vmatprep.subr.bf16.mxu0 0
    %1205 = vmatpush2.bf16.msra.mxu0 0
    %1206 = vmatprep.subr.bf16.mxu0 0
    %1207 = vmatpush2.bf16.msra.mxu0 0
    %1208 = vmatprep.subr.bf16.mxu0 0
    %1209 = vmatpush2.bf16.msra.mxu0 0
    %1210 = vmatprep.subr.bf16.mxu0 0
    %1211 = vmatpush2.bf16.msra.mxu0 0
    %1212 = vmatprep.mubr.bf16.mxu0 0
    %1213 = vmatmul.mubr.bf16.gmra.mxu0 %v1178
    %v1214 = vpop.f32.mrf.mxu0
    %v1215 = vadd.f32 %v1127, %v1214
    %v1216 = vpop.f32.mrf.mxu0
    %v1217 = vadd.f32 %v1131, %v1216
    %v1218 = vpop.f32.mrf.mxu0
    %v1219 = vpop.f32.mrf.mxu0
    %1220 = vdwg.mxu0
    %v1222 = vlaneseq
    %v1223 = vshrl.u32 %v1222, 7
    %v1224 = vsub.s32 0, %v1223
    %v1225 = vrot.slane %v66, %v1224
    %v1226 = vlaneseq
    %v1227 = vshrl.u32 %v1226, 7
    %v1228 = vsub.s32 1, %v1227
    %v1229 = vrot.slane %v66, %v1228
    %v1240 = vunpack.c.l.b16 %v38
    %v1241 = vunpack.c.h.b16 %v38
    %v1242 = vunpack.c.l.b16 %v39
    %v1243 = vunpack.c.h.b16 %v39
    %v1244 = vunpack.c.l.b16 %v40
    %v1245 = vunpack.c.h.b16 %v40
    %v1246 = vunpack.c.l.b16 %v41
    %v1247 = vunpack.c.h.b16 %v41
    %v1248 = vunpack.c.l.b16 %v42
    %v1249 = vunpack.c.h.b16 %v42
    %v1250 = vunpack.c.l.b16 %v43
    %v1251 = vunpack.c.h.b16 %v43
    %v1252 = vunpack.c.l.b16 %v44
    %v1253 = vunpack.c.h.b16 %v44
    %v1254 = vunpack.c.l.b16 %v45
    %v1255 = vunpack.c.h.b16 %v45
    %v1256 = vpack.c.b16 %v1242, %v1240
    %v1257 = vpack.c.b16 %v1243, %v1241
    %v1258 = vpack.c.b16 %v1246, %v1244
    %v1259 = vpack.c.b16 %v1247, %v1245
    %v1260 = vpack.c.b16 %v1250, %v1248
    %v1261 = vpack.c.b16 %v1251, %v1249
    %v1262 = vpack.c.b16 %v1254, %v1252
    %v1263 = vpack.c.b16 %v1255, %v1253
    %1272 = vmatprep.subr.bf16.mxu0 0
    %1273 = vmatpush1.bf16.msra.mxu0 0
    %1274 = vmatprep.subr.bf16.mxu0 0
    %1275 = vmatpush1.bf16.msra.mxu0 0
    %1276 = vmatprep.subr.bf16.mxu0 0
    %1277 = vmatpush1.bf16.msra.mxu0 0
    %1278 = vmatprep.subr.bf16.mxu0 0
    %1279 = vmatpush1.bf16.msra.mxu0 0
    %1280 = vmatprep.subr.bf16.mxu0 %v1263
    %1281 = vmatpush1.bf16.msra.mxu0 %v1262
    %1282 = vmatprep.subr.bf16.mxu0 %v1261
    %1283 = vmatpush1.bf16.msra.mxu0 %v1260
    %1284 = vmatprep.subr.bf16.mxu0 %v1259
    %1285 = vmatpush1.bf16.msra.mxu0 %v1258
    %1286 = vmatprep.subr.bf16.mxu0 %v1257
    %1287 = vmatpush1.bf16.msra.mxu0 %v1256
    %1288 = vmatprep.subr.bf16.mxu0 0
    %1289 = vmatpush2.bf16.msra.mxu0 0
    %1290 = vmatprep.subr.bf16.mxu0 0
    %1291 = vmatpush2.bf16.msra.mxu0 0
    %1292 = vmatprep.subr.bf16.mxu0 0
    %1293 = vmatpush2.bf16.msra.mxu0 0
    %1294 = vmatprep.subr.bf16.mxu0 0
    %1295 = vmatpush2.bf16.msra.mxu0 0
    %1296 = vmatprep.subr.bf16.mxu0 0
    %1297 = vmatpush2.bf16.msra.mxu0 0
    %1298 = vmatprep.subr.bf16.mxu0 0
    %1299 = vmatpush2.bf16.msra.mxu0 0
    %1300 = vmatprep.subr.bf16.mxu0 0
    %1301 = vmatpush2.bf16.msra.mxu0 0
    %1302 = vmatprep.subr.bf16.mxu0 0
    %1303 = vmatpush2.bf16.msra.mxu0 0
    %1304 = vmatprep.mubr.bf16.mxu0 0
    %1305 = vmatmul.mubr.bf16.gmra.mxu0 %v1178
    %v1306 = vpop.f32.mrf.mxu0
    %v1307 = vadd.f32 %v1225, %v1306
    %v1308 = vpop.f32.mrf.mxu0
    %v1309 = vadd.f32 %v1229, %v1308
    %v1310 = vpop.f32.mrf.mxu0
    %v1311 = vpop.f32.mrf.mxu0
    %1312 = vdwg.mxu0
    %v1321 = vunpack.c.l.b16 %v46
    %v1322 = vunpack.c.h.b16 %v46
    %v1323 = vunpack.c.l.b16 %v47
    %v1324 = vunpack.c.h.b16 %v47
    %v1325 = vunpack.c.l.b16 %v48
    %v1326 = vunpack.c.h.b16 %v48
    %v1327 = vunpack.c.l.b16 %v49
    %v1328 = vunpack.c.h.b16 %v49
    %v1329 = vunpack.c.l.b16 %v50
    %v1330 = vunpack.c.h.b16 %v50
    %v1331 = vunpack.c.l.b16 %v51
    %v1332 = vunpack.c.h.b16 %v51
    %v1333 = vunpack.c.l.b16 %v52
    %v1334 = vunpack.c.h.b16 %v52
    %v1335 = vunpack.c.l.b16 %v53
    %v1336 = vunpack.c.h.b16 %v53
    %v1337 = vpack.c.b16 %v1323, %v1321
    %v1338 = vpack.c.b16 %v1324, %v1322
    %v1339 = vpack.c.b16 %v1327, %v1325
    %v1340 = vpack.c.b16 %v1328, %v1326
    %v1341 = vpack.c.b16 %v1331, %v1329
    %v1342 = vpack.c.b16 %v1332, %v1330
    %v1343 = vpack.c.b16 %v1335, %v1333
    %v1344 = vpack.c.b16 %v1336, %v1334
    %1353 = vmatprep.subr.bf16.mxu0 0
    %1354 = vmatpush1.bf16.msra.mxu0 0
    %1355 = vmatprep.subr.bf16.mxu0 0
    %1356 = vmatpush1.bf16.msra.mxu0 0
    %1357 = vmatprep.subr.bf16.mxu0 0
    %1358 = vmatpush1.bf16.msra.mxu0 0
    %1359 = vmatprep.subr.bf16.mxu0 0
    %1360 = vmatpush1.bf16.msra.mxu0 0
    %1361 = vmatprep.subr.bf16.mxu0 %v1344
    %1362 = vmatpush1.bf16.msra.mxu0 %v1343
    %1363 = vmatprep.subr.bf16.mxu0 %v1342
    %1364 = vmatpush1.bf16.msra.mxu0 %v1341
    %1365 = vmatprep.subr.bf16.mxu0 %v1340
    %1366 = vmatpush1.bf16.msra.mxu0 %v1339
    %1367 = vmatprep.subr.bf16.mxu0 %v1338
    %1368 = vmatpush1.bf16.msra.mxu0 %v1337
    %1369 = vmatprep.subr.bf16.mxu0 0
    %1370 = vmatpush2.bf16.msra.mxu0 0
    %1371 = vmatprep.subr.bf16.mxu0 0
    %1372 = vmatpush2.bf16.msra.mxu0 0
    %1373 = vmatprep.subr.bf16.mxu0 0
    %1374 = vmatpush2.bf16.msra.mxu0 0
    %1375 = vmatprep.subr.bf16.mxu0 0
    %1376 = vmatpush2.bf16.msra.mxu0 0
    %1377 = vmatprep.subr.bf16.mxu0 0
    %1378 = vmatpush2.bf16.msra.mxu0 0
    %1379 = vmatprep.subr.bf16.mxu0 0
    %1380 = vmatpush2.bf16.msra.mxu0 0
    %1381 = vmatprep.subr.bf16.mxu0 0
    %1382 = vmatpush2.bf16.msra.mxu0 0
    %1383 = vmatprep.subr.bf16.mxu0 0
    %1384 = vmatpush2.bf16.msra.mxu0 0
    %1385 = vmatprep.mubr.bf16.mxu0 0
    %1386 = vmatmul.mubr.bf16.gmra.mxu0 %v387
    %v1387 = vpop.f32.mrf.mxu0
    %v1388 = vadd.f32 0.0, %v1387
    %v1389 = vpop.f32.mrf.mxu0
    %v1390 = vadd.f32 0.0, %v1389
    %v1391 = vpop.f32.mrf.mxu0
    %v1392 = vpop.f32.mrf.mxu0
    %1393 = vdwg.mxu0
    %v1396 = vrot.slane %v1307, 7
    %v1397 = vrot.slane %v1309, 7
    %v1400 = vadd.f32 %v1215, %v1396
    %v1401 = vadd.f32 %v1217, %v1397
    %v1402 = vadd.f32 %v1400, %v1388
    %v1403 = vadd.f32 %v1401, %v1390
    %v1404 = vxor.u32 %v1402, 2147483648
    %v1405 = vxor.u32 %v1403, 2147483648
    %v1406 = vmul.f32 %v1404, 1.442695
    %v1407 = vpow.pop %v1406
    %v1408 = vmul.f32 %v1405, 1.442695
    %v1409 = vpow.pop %v1408
    %v1410 = vadd.f32 %v1407, 1.0
    %v1411 = vadd.f32 %v1409, 1.0
    %v1412 = vrcp.pop %v1410
    %v1413 = vmul.f32 1.0, %v1412
    %v1414 = vrcp.pop %v1411
    %v1415 = vmul.f32 1.0, %v1414
    %v1416 = vtanh.pop %v1403
    %v1417 = vmul.f32 %v1413, 0.0
    %v1418 = vmul.f32 %v1413, %v1416
    %1420 = vrot.lane.b32.xlu0 %v1418, 64
    %v1421 = vpop.permute.xlu0 %1420
    %v1423 = vadd.f32 %v1417, %v1421
    %v1424 = vtanh.pop %v1423
    %v1425 = vmul.f32 %v1415, %v1424
    %v1426 = vpack.c.bf16 %v1425, %v1425
    %1428 = vrot.lane.b32.xlu0 %v1426, 64
    %v1429 = vpop.permute.xlu0 %1428
    %v1431 = vsel %vm385, %v1429, 0
    %1433 = vmatprep.subr.bf16.mxu0 0
    %1434 = vmatpush1.bf16.msra.mxu0 0
    %1435 = vmatprep.subr.bf16.mxu0 0
    %1436 = vmatpush1.bf16.msra.mxu0 0
    %1437 = vmatprep.subr.bf16.mxu0 0
    %1438 = vmatpush1.bf16.msra.mxu0 0
    %1439 = vmatprep.subr.bf16.mxu0 0
    %1440 = vmatpush1.bf16.msra.mxu0 0
    %1441 = vmatprep.subr.bf16.mxu0 %v1344
    %1442 = vmatpush1.bf16.msra.mxu0 %v1343
    %1443 = vmatprep.subr.bf16.mxu0 %v1342
    %1444 = vmatpush1.bf16.msra.mxu0 %v1341
    %1445 = vmatprep.subr.bf16.mxu0 %v1340
    %1446 = vmatpush1.bf16.msra.mxu0 %v1339
    %1447 = vmatprep.subr.bf16.mxu0 %v1338
    %1448 = vmatpush1.bf16.msra.mxu0 %v1337
    %1449 = vmatprep.subr.bf16.mxu0 0
    %1450 = vmatpush2.bf16.msra.mxu0 0
    %1451 = vmatprep.subr.bf16.mxu0 0
    %1452 = vmatpush2.bf16.msra.mxu0 0
    %1453 = vmatprep.subr.bf16.mxu0 0
    %1454 = vmatpush2.bf16.msra.mxu0 0
    %1455 = vmatprep.subr.bf16.mxu0 0
    %1456 = vmatpush2.bf16.msra.mxu0 0
    %1457 = vmatprep.subr.bf16.mxu0 0
    %1458 = vmatpush2.bf16.msra.mxu0 0
    %1459 = vmatprep.subr.bf16.mxu0 0
    %1460 = vmatpush2.bf16.msra.mxu0 0
    %1461 = vmatprep.subr.bf16.mxu0 0
    %1462 = vmatpush2.bf16.msra.mxu0 0
    %1463 = vmatprep.subr.bf16.mxu0 0
    %1464 = vmatpush2.bf16.msra.mxu0 0
    %1465 = vmatprep.mubr.bf16.mxu0 0
    %1466 = vmatmul.mubr.bf16.gmra.mxu0 %v1431
    %v1467 = vpop.f32.mrf.mxu0
    %v1468 = vadd.f32 0.0, %v1467
    %v1469 = vpop.f32.mrf.mxu0
    %v1470 = vadd.f32 0.0, %v1469
    %v1471 = vpop.f32.mrf.mxu0
    %v1472 = vpop.f32.mrf.mxu0
    %1473 = vdwg.mxu0
    %v1474 = vrot.slane %v1307, 5
    %v1475 = vrot.slane %v1309, 5
    %v1478 = vadd.f32 %v1215, %v1474
    %v1479 = vadd.f32 %v1217, %v1475
    %v1482 = vrot.slane %v1468, 7
    %v1483 = vrot.slane %v1470, 7
    %v1486 = vadd.f32 %v1478, %v1482
    %v1487 = vadd.f32 %v1479, %v1483
    %v1488 = vxor.u32 %v1486, 2147483648
    %v1489 = vxor.u32 %v1487, 2147483648
    %v1490 = vmul.f32 %v1488, 1.442695
    %v1491 = vpow.pop %v1490
    %v1492 = vmul.f32 %v1489, 1.442695
    %v1493 = vpow.pop %v1492
    %v1494 = vadd.f32 %v1491, 1.0
    %v1495 = vadd.f32 %v1493, 1.0
    %v1496 = vrcp.pop %v1494
    %v1497 = vmul.f32 1.0, %v1496
    %v1498 = vrcp.pop %v1495
    %v1499 = vmul.f32 1.0, %v1498
    %v1500 = vtanh.pop %v1487
    %v1502 = vrot.slane %v1423, 7
    %v1504 = vmul.f32 %v1497, %v1502
    %v1505 = vmul.f32 %v1497, %v1500
    %1507 = vrot.lane.b32.xlu0 %v1505, 64
    %v1508 = vpop.permute.xlu0 %1507
    %v1510 = vadd.f32 %v1504, %v1508
    %v1511 = vtanh.pop %v1510
    %v1512 = vmul.f32 %v1499, %v1511
    %v1513 = vpack.c.bf16 %v1512, %v1512
    %v1515 = vshrl.u32 %v1513, 16
    %1517 = vrot.lane.b32.xlu0 %v1515, 64
    %v1518 = vpop.permute.xlu0 %1517
    %v1520 = vsel %vm385, %v1518, 0
    %1522 = vmatprep.subr.bf16.mxu0 0
    %1523 = vmatpush1.bf16.msra.mxu0 0
    %1524 = vmatprep.subr.bf16.mxu0 0
    %1525 = vmatpush1.bf16.msra.mxu0 0
    %1526 = vmatprep.subr.bf16.mxu0 0
    %1527 = vmatpush1.bf16.msra.mxu0 0
    %1528 = vmatprep.subr.bf16.mxu0 0
    %1529 = vmatpush1.bf16.msra.mxu0 0
    %1530 = vmatprep.subr.bf16.mxu0 %v1344
    %1531 = vmatpush1.bf16.msra.mxu0 %v1343
    %1532 = vmatprep.subr.bf16.mxu0 %v1342
    %1533 = vmatpush1.bf16.msra.mxu0 %v1341
    %1534 = vmatprep.subr.bf16.mxu0 %v1340
    %1535 = vmatpush1.bf16.msra.mxu0 %v1339
    %1536 = vmatprep.subr.bf16.mxu0 %v1338
    %1537 = vmatpush1.bf16.msra.mxu0 %v1337
    %1538 = vmatprep.subr.bf16.mxu0 0
    %1539 = vmatpush2.bf16.msra.mxu0 0
    %1540 = vmatprep.subr.bf16.mxu0 0
    %1541 = vmatpush2.bf16.msra.mxu0 0
    %1542 = vmatprep.subr.bf16.mxu0 0
    %1543 = vmatpush2.bf16.msra.mxu0 0
    %1544 = vmatprep.subr.bf16.mxu0 0
    %1545 = vmatpush2.bf16.msra.mxu0 0
    %1546 = vmatprep.subr.bf16.mxu0 0
    %1547 = vmatpush2.bf16.msra.mxu0 0
    %1548 = vmatprep.subr.bf16.mxu0 0
    %1549 = vmatpush2.bf16.msra.mxu0 0
    %1550 = vmatprep.subr.bf16.mxu0 0
    %1551 = vmatpush2.bf16.msra.mxu0 0
    %1552 = vmatprep.subr.bf16.mxu0 0
    %1553 = vmatpush2.bf16.msra.mxu0 0
    %1554 = vmatprep.mubr.bf16.mxu0 0
    %1555 = vmatmul.mubr.bf16.gmra.mxu0 %v1520
    %v1556 = vpop.f32.mrf.mxu0
    %v1557 = vadd.f32 0.0, %v1556
    %v1558 = vpop.f32.mrf.mxu0
    %v1559 = vadd.f32 0.0, %v1558
    %v1560 = vpop.f32.mrf.mxu0
    %v1561 = vpop.f32.mrf.mxu0
    %1562 = vdwg.mxu0
    %v1563 = vrot.slane %v1307, 3
    %v1564 = vrot.slane %v1309, 3
    %v1567 = vadd.f32 %v1215, %v1563
    %v1568 = vadd.f32 %v1217, %v1564
    %v1571 = vrot.slane %v1557, 6
    %v1572 = vrot.slane %v1559, 6
    %v1575 = vadd.f32 %v1567, %v1571
    %v1576 = vadd.f32 %v1568, %v1572
    %v1577 = vxor.u32 %v1575, 2147483648
    %v1578 = vxor.u32 %v1576, 2147483648
    %v1579 = vmul.f32 %v1577, 1.442695
    %v1580 = vpow.pop %v1579
    %v1581 = vmul.f32 %v1578, 1.442695
    %v1582 = vpow.pop %v1581
    %v1583 = vadd.f32 %v1580, 1.0
    %v1584 = vadd.f32 %v1582, 1.0
    %v1585 = vrcp.pop %v1583
    %v1586 = vmul.f32 1.0, %v1585
    %v1587 = vrcp.pop %v1584
    %v1588 = vmul.f32 1.0, %v1587
    %v1589 = vtanh.pop %v1576
    %v1591 = vrot.slane %v1510, 7
    %v1593 = vmul.f32 %v1586, %v1591
    %v1594 = vmul.f32 %v1586, %v1589
    %1596 = vrot.lane.b32.xlu0 %v1594, 64
    %v1597 = vpop.permute.xlu0 %1596
    %v1599 = vadd.f32 %v1593, %v1597
    %v1600 = vtanh.pop %v1599
    %v1601 = vmul.f32 %v1588, %v1600
    %v1602 = vpack.c.bf16 %v1601, %v1601
    %v1604 = vrot.slane %v1602, 1
    %1605 = vrot.lane.b32.xlu0 %v1604, 64
    %v1606 = vpop.permute.xlu0 %1605
    %v1608 = vsel %vm385, %v1606, 0
    %1610 = vmatprep.subr.bf16.mxu0 0
    %1611 = vmatpush1.bf16.msra.mxu0 0
    %1612 = vmatprep.subr.bf16.mxu0 0
    %1613 = vmatpush1.bf16.msra.mxu0 0
    %1614 = vmatprep.subr.bf16.mxu0 0
    %1615 = vmatpush1.bf16.msra.mxu0 0
    %1616 = vmatprep.subr.bf16.mxu0 0
    %1617 = vmatpush1.bf16.msra.mxu0 0
    %1618 = vmatprep.subr.bf16.mxu0 %v1344
    %1619 = vmatpush1.bf16.msra.mxu0 %v1343
    %1620 = vmatprep.subr.bf16.mxu0 %v1342
    %1621 = vmatpush1.bf16.msra.mxu0 %v1341
    %1622 = vmatprep.subr.bf16.mxu0 %v1340
    %1623 = vmatpush1.bf16.msra.mxu0 %v1339
    %1624 = vmatprep.subr.bf16.mxu0 %v1338
    %1625 = vmatpush1.bf16.msra.mxu0 %v1337
    %1626 = vmatprep.subr.bf16.mxu0 0
    %1627 = vmatpush2.bf16.msra.mxu0 0
    %1628 = vmatprep.subr.bf16.mxu0 0
    %1629 = vmatpush2.bf16.msra.mxu0 0
    %1630 = vmatprep.subr.bf16.mxu0 0
    %1631 = vmatpush2.bf16.msra.mxu0 0
    %1632 = vmatprep.subr.bf16.mxu0 0
    %1633 = vmatpush2.bf16.msra.mxu0 0
    %1634 = vmatprep.subr.bf16.mxu0 0
    %1635 = vmatpush2.bf16.msra.mxu0 0
    %1636 = vmatprep.subr.bf16.mxu0 0
    %1637 = vmatpush2.bf16.msra.mxu0 0
    %1638 = vmatprep.subr.bf16.mxu0 0
    %1639 = vmatpush2.bf16.msra.mxu0 0
    %1640 = vmatprep.subr.bf16.mxu0 0
    %1641 = vmatpush2.bf16.msra.mxu0 0
    %1642 = vmatprep.mubr.bf16.mxu0 0
    %1643 = vmatmul.mubr.bf16.gmra.mxu0 %v1608
    %v1644 = vpop.f32.mrf.mxu0
    %v1645 = vadd.f32 0.0, %v1644
    %v1646 = vpop.f32.mrf.mxu0
    %v1647 = vadd.f32 0.0, %v1646
    %v1648 = vpop.f32.mrf.mxu0
    %v1649 = vpop.f32.mrf.mxu0
    %1650 = vdwg.mxu0
    %v1651 = vrot.slane %v1307, 1
    %v1652 = vrot.slane %v1309, 1
    %v1655 = vadd.f32 %v1215, %v1651
    %v1656 = vadd.f32 %v1217, %v1652
    %v1659 = vrot.slane %v1645, 5
    %v1660 = vrot.slane %v1647, 5
    %v1663 = vadd.f32 %v1655, %v1659
    %v1664 = vadd.f32 %v1656, %v1660
    %v1665 = vxor.u32 %v1663, 2147483648
    %v1666 = vxor.u32 %v1664, 2147483648
    %v1667 = vmul.f32 %v1665, 1.442695
    %v1668 = vpow.pop %v1667
    %v1669 = vmul.f32 %v1666, 1.442695
    %v1670 = vpow.pop %v1669
    %v1671 = vadd.f32 %v1668, 1.0
    %v1672 = vadd.f32 %v1670, 1.0
    %v1673 = vrcp.pop %v1671
    %v1674 = vmul.f32 1.0, %v1673
    %v1675 = vrcp.pop %v1672
    %v1676 = vmul.f32 1.0, %v1675
    %v1677 = vtanh.pop %v1664
    %v1679 = vrot.slane %v1599, 7
    %v1681 = vmul.f32 %v1674, %v1679
    %v1682 = vmul.f32 %v1674, %v1677
    %1684 = vrot.lane.b32.xlu0 %v1682, 64
    %v1685 = vpop.permute.xlu0 %1684
    %v1687 = vadd.f32 %v1681, %v1685
    %v1688 = vtanh.pop %v1687
    %v1689 = vmul.f32 %v1676, %v1688
    %v1690 = vpack.c.bf16 %v1689, %v1689
    %v1692 = vshrl.u32 %v1690, 16
    %v1694 = vrot.slane %v1692, 1
    %1695 = vrot.lane.b32.xlu0 %v1694, 64
    %v1696 = vpop.permute.xlu0 %1695
    %v1698 = vsel %vm385, %v1696, 0
    %1700 = vmatprep.subr.bf16.mxu0 0
    %1701 = vmatpush1.bf16.msra.mxu0 0
    %1702 = vmatprep.subr.bf16.mxu0 0
    %1703 = vmatpush1.bf16.msra.mxu0 0
    %1704 = vmatprep.subr.bf16.mxu0 0
    %1705 = vmatpush1.bf16.msra.mxu0 0
    %1706 = vmatprep.subr.bf16.mxu0 0
    %1707 = vmatpush1.bf16.msra.mxu0 0
    %1708 = vmatprep.subr.bf16.mxu0 %v1344
    %1709 = vmatpush1.bf16.msra.mxu0 %v1343
    %1710 = vmatprep.subr.bf16.mxu0 %v1342
    %1711 = vmatpush1.bf16.msra.mxu0 %v1341
    %1712 = vmatprep.subr.bf16.mxu0 %v1340
    %1713 = vmatpush1.bf16.msra.mxu0 %v1339
    %1714 = vmatprep.subr.bf16.mxu0 %v1338
    %1715 = vmatpush1.bf16.msra.mxu0 %v1337
    %1716 = vmatprep.subr.bf16.mxu0 0
    %1717 = vmatpush2.bf16.msra.mxu0 0
    %1718 = vmatprep.subr.bf16.mxu0 0
    %1719 = vmatpush2.bf16.msra.mxu0 0
    %1720 = vmatprep.subr.bf16.mxu0 0
    %1721 = vmatpush2.bf16.msra.mxu0 0
    %1722 = vmatprep.subr.bf16.mxu0 0
    %1723 = vmatpush2.bf16.msra.mxu0 0
    %1724 = vmatprep.subr.bf16.mxu0 0
    %1725 = vmatpush2.bf16.msra.mxu0 0
    %1726 = vmatprep.subr.bf16.mxu0 0
    %1727 = vmatpush2.bf16.msra.mxu0 0
    %1728 = vmatprep.subr.bf16.mxu0 0
    %1729 = vmatpush2.bf16.msra.mxu0 0
    %1730 = vmatprep.subr.bf16.mxu0 0
    %1731 = vmatpush2.bf16.msra.mxu0 0
    %1732 = vmatprep.mubr.bf16.mxu0 0
    %1733 = vmatmul.mubr.bf16.gmra.mxu0 %v1698
    %v1734 = vpop.f32.mrf.mxu0
    %v1735 = vadd.f32 0.0, %v1734
    %v1736 = vpop.f32.mrf.mxu0
    %v1737 = vadd.f32 0.0, %v1736
    %v1738 = vpop.f32.mrf.mxu0
    %v1739 = vpop.f32.mrf.mxu0
    %1740 = vdwg.mxu0
    %v1743 = vrot.slane %v1735, 4
    %v1744 = vrot.slane %v1737, 4
    %v1747 = vadd.f32 %v1400, %v1743
    %v1748 = vadd.f32 %v1401, %v1744
    %v1749 = vxor.u32 %v1747, 2147483648
    %v1750 = vxor.u32 %v1748, 2147483648
    %v1751 = vmul.f32 %v1749, 1.442695
    %v1752 = vpow.pop %v1751
    %v1753 = vmul.f32 %v1750, 1.442695
    %v1754 = vpow.pop %v1753
    %v1755 = vadd.f32 %v1752, 1.0
    %v1756 = vadd.f32 %v1754, 1.0
    %v1757 = vrcp.pop %v1755
    %v1758 = vmul.f32 1.0, %v1757
    %v1759 = vrcp.pop %v1756
    %v1760 = vmul.f32 1.0, %v1759
    %v1761 = vtanh.pop %v1748
    %v1763 = vrot.slane %v1687, 7
    %v1765 = vmul.f32 %v1758, %v1763
    %v1766 = vmul.f32 %v1758, %v1761
    %1768 = vrot.lane.b32.xlu0 %v1766, 64
    %v1769 = vpop.permute.xlu0 %1768
    %v1771 = vadd.f32 %v1765, %v1769
    %v1772 = vtanh.pop %v1771
    %v1773 = vmul.f32 %v1760, %v1772
    %v1774 = vpack.c.bf16 %v1773, %v1773
    %v1776 = vrot.slane %v1774, 2
    %1777 = vrot.lane.b32.xlu0 %v1776, 64
    %v1778 = vpop.permute.xlu0 %1777
    %v1780 = vsel %vm385, %v1778, 0
    %1782 = vmatprep.subr.bf16.mxu0 0
    %1783 = vmatpush1.bf16.msra.mxu0 0
    %1784 = vmatprep.subr.bf16.mxu0 0
    %1785 = vmatpush1.bf16.msra.mxu0 0
    %1786 = vmatprep.subr.bf16.mxu0 0
    %1787 = vmatpush1.bf16.msra.mxu0 0
    %1788 = vmatprep.subr.bf16.mxu0 0
    %1789 = vmatpush1.bf16.msra.mxu0 0
    %1790 = vmatprep.subr.bf16.mxu0 %v1344
    %1791 = vmatpush1.bf16.msra.mxu0 %v1343
    %1792 = vmatprep.subr.bf16.mxu0 %v1342
    %1793 = vmatpush1.bf16.msra.mxu0 %v1341
    %1794 = vmatprep.subr.bf16.mxu0 %v1340
    %1795 = vmatpush1.bf16.msra.mxu0 %v1339
    %1796 = vmatprep.subr.bf16.mxu0 %v1338
    %1797 = vmatpush1.bf16.msra.mxu0 %v1337
    %1798 = vmatprep.subr.bf16.mxu0 0
    %1799 = vmatpush2.bf16.msra.mxu0 0
    %1800 = vmatprep.subr.bf16.mxu0 0
    %1801 = vmatpush2.bf16.msra.mxu0 0
    %1802 = vmatprep.subr.bf16.mxu0 0
    %1803 = vmatpush2.bf16.msra.mxu0 0
    %1804 = vmatprep.subr.bf16.mxu0 0
    %1805 = vmatpush2.bf16.msra.mxu0 0
    %1806 = vmatprep.subr.bf16.mxu0 0
    %1807 = vmatpush2.bf16.msra.mxu0 0
    %1808 = vmatprep.subr.bf16.mxu0 0
    %1809 = vmatpush2.bf16.msra.mxu0 0
    %1810 = vmatprep.subr.bf16.mxu0 0
    %1811 = vmatpush2.bf16.msra.mxu0 0
    %1812 = vmatprep.subr.bf16.mxu0 0
    %1813 = vmatpush2.bf16.msra.mxu0 0
    %1814 = vmatprep.mubr.bf16.mxu0 0
    %1815 = vmatmul.mubr.bf16.gmra.mxu0 %v1780
    %v1816 = vpop.f32.mrf.mxu0
    %v1817 = vadd.f32 0.0, %v1816
    %v1818 = vpop.f32.mrf.mxu0
    %v1819 = vadd.f32 0.0, %v1818
    %v1820 = vpop.f32.mrf.mxu0
    %v1821 = vpop.f32.mrf.mxu0
    %1822 = vdwg.mxu0
    %v1825 = vrot.slane %v1817, 3
    %v1826 = vrot.slane %v1819, 3
    %v1829 = vadd.f32 %v1478, %v1825
    %v1830 = vadd.f32 %v1479, %v1826
    %v1831 = vxor.u32 %v1829, 2147483648
    %v1832 = vxor.u32 %v1830, 2147483648
    %v1833 = vmul.f32 %v1831, 1.442695
    %v1834 = vpow.pop %v1833
    %v1835 = vmul.f32 %v1832, 1.442695
    %v1836 = vpow.pop %v1835
    %v1837 = vadd.f32 %v1834, 1.0
    %v1838 = vadd.f32 %v1836, 1.0
    %v1839 = vrcp.pop %v1837
    %v1840 = vmul.f32 1.0, %v1839
    %v1841 = vrcp.pop %v1838
    %v1842 = vmul.f32 1.0, %v1841
    %v1843 = vtanh.pop %v1830
    %v1845 = vrot.slane %v1771, 7
    %v1847 = vmul.f32 %v1840, %v1845
    %v1848 = vmul.f32 %v1840, %v1843
    %1850 = vrot.lane.b32.xlu0 %v1848, 64
    %v1851 = vpop.permute.xlu0 %1850
    %v1853 = vadd.f32 %v1847, %v1851
    %v1854 = vtanh.pop %v1853
    %v1855 = vmul.f32 %v1842, %v1854
    %v1856 = vpack.c.bf16 %v1855, %v1855
    %v1858 = vshrl.u32 %v1856, 16
    %v1860 = vrot.slane %v1858, 2
    %1861 = vrot.lane.b32.xlu0 %v1860, 64
    %v1862 = vpop.permute.xlu0 %1861
    %v1864 = vsel %vm385, %v1862, 0
    %1866 = vmatprep.subr.bf16.mxu0 0
    %1867 = vmatpush1.bf16.msra.mxu0 0
    %1868 = vmatprep.subr.bf16.mxu0 0
    %1869 = vmatpush1.bf16.msra.mxu0 0
    %1870 = vmatprep.subr.bf16.mxu0 0
    %1871 = vmatpush1.bf16.msra.mxu0 0
    %1872 = vmatprep.subr.bf16.mxu0 0
    %1873 = vmatpush1.bf16.msra.mxu0 0
    %1874 = vmatprep.subr.bf16.mxu0 %v1344
    %1875 = vmatpush1.bf16.msra.mxu0 %v1343
    %1876 = vmatprep.subr.bf16.mxu0 %v1342
    %1877 = vmatpush1.bf16.msra.mxu0 %v1341
    %1878 = vmatprep.subr.bf16.mxu0 %v1340
    %1879 = vmatpush1.bf16.msra.mxu0 %v1339
    %1880 = vmatprep.subr.bf16.mxu0 %v1338
    %1881 = vmatpush1.bf16.msra.mxu0 %v1337
    %1882 = vmatprep.subr.bf16.mxu0 0
    %1883 = vmatpush2.bf16.msra.mxu0 0
    %1884 = vmatprep.subr.bf16.mxu0 0
    %1885 = vmatpush2.bf16.msra.mxu0 0
    %1886 = vmatprep.subr.bf16.mxu0 0
    %1887 = vmatpush2.bf16.msra.mxu0 0
    %1888 = vmatprep.subr.bf16.mxu0 0
    %1889 = vmatpush2.bf16.msra.mxu0 0
    %1890 = vmatprep.subr.bf16.mxu0 0
    %1891 = vmatpush2.bf16.msra.mxu0 0
    %1892 = vmatprep.subr.bf16.mxu0 0
    %1893 = vmatpush2.bf16.msra.mxu0 0
    %1894 = vmatprep.subr.bf16.mxu0 0
    %1895 = vmatpush2.bf16.msra.mxu0 0
    %1896 = vmatprep.subr.bf16.mxu0 0
    %1897 = vmatpush2.bf16.msra.mxu0 0
    %1898 = vmatprep.mubr.bf16.mxu0 0
    %1899 = vmatmul.mubr.bf16.gmra.mxu0 %v1864
    %v1900 = vpop.f32.mrf.mxu0
    %v1901 = vadd.f32 0.0, %v1900
    %v1902 = vpop.f32.mrf.mxu0
    %v1903 = vadd.f32 0.0, %v1902
    %v1904 = vpop.f32.mrf.mxu0
    %v1905 = vpop.f32.mrf.mxu0
    %1906 = vdwg.mxu0
    %v1909 = vrot.slane %v1901, 2
    %v1910 = vrot.slane %v1903, 2
    %v1913 = vadd.f32 %v1567, %v1909
    %v1914 = vadd.f32 %v1568, %v1910
    %v1915 = vxor.u32 %v1913, 2147483648
    %v1916 = vxor.u32 %v1914, 2147483648
    %v1917 = vmul.f32 %v1915, 1.442695
    %v1918 = vpow.pop %v1917
    %v1919 = vmul.f32 %v1916, 1.442695
    %v1920 = vpow.pop %v1919
    %v1921 = vadd.f32 %v1918, 1.0
    %v1922 = vadd.f32 %v1920, 1.0
    %v1923 = vrcp.pop %v1921
    %v1924 = vmul.f32 1.0, %v1923
    %v1925 = vrcp.pop %v1922
    %v1926 = vmul.f32 1.0, %v1925
    %v1927 = vtanh.pop %v1914
    %v1929 = vrot.slane %v1853, 7
    %v1931 = vmul.f32 %v1924, %v1929
    %v1932 = vmul.f32 %v1924, %v1927
    %1934 = vrot.lane.b32.xlu0 %v1932, 64
    %v1935 = vpop.permute.xlu0 %1934
    %v1937 = vadd.f32 %v1931, %v1935
    %v1938 = vtanh.pop %v1937
    %v1939 = vmul.f32 %v1926, %v1938
    %v1940 = vpack.c.bf16 %v1939, %v1939
    %v1942 = vrot.slane %v1940, 3
    %1943 = vrot.lane.b32.xlu0 %v1942, 64
    %v1944 = vpop.permute.xlu0 %1943
    %v1946 = vsel %vm385, %v1944, 0
    %1948 = vmatprep.subr.bf16.mxu0 0
    %1949 = vmatpush1.bf16.msra.mxu0 0
    %1950 = vmatprep.subr.bf16.mxu0 0
    %1951 = vmatpush1.bf16.msra.mxu0 0
    %1952 = vmatprep.subr.bf16.mxu0 0
    %1953 = vmatpush1.bf16.msra.mxu0 0
    %1954 = vmatprep.subr.bf16.mxu0 0
    %1955 = vmatpush1.bf16.msra.mxu0 0
    %1956 = vmatprep.subr.bf16.mxu0 %v1344
    %1957 = vmatpush1.bf16.msra.mxu0 %v1343
    %1958 = vmatprep.subr.bf16.mxu0 %v1342
    %1959 = vmatpush1.bf16.msra.mxu0 %v1341
    %1960 = vmatprep.subr.bf16.mxu0 %v1340
    %1961 = vmatpush1.bf16.msra.mxu0 %v1339
    %1962 = vmatprep.subr.bf16.mxu0 %v1338
    %1963 = vmatpush1.bf16.msra.mxu0 %v1337
    %1964 = vmatprep.subr.bf16.mxu0 0
    %1965 = vmatpush2.bf16.msra.mxu0 0
    %1966 = vmatprep.subr.bf16.mxu0 0
    %1967 = vmatpush2.bf16.msra.mxu0 0
    %1968 = vmatprep.subr.bf16.mxu0 0
    %1969 = vmatpush2.bf16.msra.mxu0 0
    %1970 = vmatprep.subr.bf16.mxu0 0
    %1971 = vmatpush2.bf16.msra.mxu0 0
    %1972 = vmatprep.subr.bf16.mxu0 0
    %1973 = vmatpush2.bf16.msra.mxu0 0
    %1974 = vmatprep.subr.bf16.mxu0 0
    %1975 = vmatpush2.bf16.msra.mxu0 0
    %1976 = vmatprep.subr.bf16.mxu0 0
    %1977 = vmatpush2.bf16.msra.mxu0 0
    %1978 = vmatprep.subr.bf16.mxu0 0
    %1979 = vmatpush2.bf16.msra.mxu0 0
    %1980 = vmatprep.mubr.bf16.mxu0 0
    %1981 = vmatmul.mubr.bf16.gmra.mxu0 %v1946
    %v1982 = vpop.f32.mrf.mxu0
    %v1983 = vadd.f32 0.0, %v1982
    %v1984 = vpop.f32.mrf.mxu0
    %v1985 = vadd.f32 0.0, %v1984
    %v1986 = vpop.f32.mrf.mxu0
    %v1987 = vpop.f32.mrf.mxu0
    %1988 = vdwg.mxu0
    %v1991 = vrot.slane %v1983, 1
    %v1992 = vrot.slane %v1985, 1
    %v1995 = vadd.f32 %v1655, %v1991
    %v1996 = vadd.f32 %v1656, %v1992
    %v1997 = vxor.u32 %v1995, 2147483648
    %v1998 = vxor.u32 %v1996, 2147483648
    %v1999 = vmul.f32 %v1997, 1.442695
    %v2000 = vpow.pop %v1999
    %v2001 = vmul.f32 %v1998, 1.442695
    %v2002 = vpow.pop %v2001
    %v2003 = vadd.f32 %v2000, 1.0
    %v2004 = vadd.f32 %v2002, 1.0
    %v2005 = vrcp.pop %v2003
    %v2006 = vmul.f32 1.0, %v2005
    %v2007 = vrcp.pop %v2004
    %v2008 = vmul.f32 1.0, %v2007
    %v2009 = vtanh.pop %v1996
    %v2011 = vrot.slane %v1937, 7
    %v2013 = vmul.f32 %v2006, %v2011
    %v2014 = vmul.f32 %v2006, %v2009
    %2016 = vrot.lane.b32.xlu0 %v2014, 64
    %v2017 = vpop.permute.xlu0 %2016
    %v2019 = vadd.f32 %v2013, %v2017
    %v2020 = vtanh.pop %v2019
    %v2021 = vmul.f32 %v2008, %v2020
    %vm2022 = vcmask 1040384
    %v2023 = vsel %vm2022, %v1425, %v1512
    %vm2024 = vcmask 1041408
    %v2025 = vsel %vm2024, %v2023, %v1601
    %vm2026 = vcmask 1042432
    %v2027 = vsel %vm2026, %v2025, %v1689
    %vm2028 = vcmask 1043456
    %v2029 = vsel %vm2028, %v2027, %v1773
    %vm2030 = vcmask 1044480
    %v2031 = vsel %vm2030, %v2029, %v1855
    %vm2032 = vcmask 1045504
    %v2033 = vsel %vm2032, %v2031, %v1939
    %vm2034 = vcmask 1046528
    %v2035 = vsel %vm2034, %v2033, %v2021
    %v2037 = vrot.slane %v2021, 7
    %v2040 = vrot.slane %v1939, 5
    %v2043 = vrot.slane %v1855, 3
    %v2046 = vrot.slane %v1773, 1
    %v2049 = vrot.slane %v1689, 7
    %v2052 = vrot.slane %v1601, 5
    %v2055 = vrot.slane %v1512, 3
    %v2058 = vrot.slane %v1425, 1
    %v2060 = vsel %vm2022, %v2037, %v2040
    %v2061 = vsel %vm2024, %v2060, %v2043
    %v2062 = vsel %vm2026, %v2061, %v2046
    %v2063 = vsel %vm2028, %v2062, %v2049
    %v2064 = vsel %vm2030, %v2063, %v2052
    %v2065 = vsel %vm2032, %v2064, %v2055
    %v2066 = vsel %vm2034, %v2065, %v2058
    %2068 = vrot.lane.b32.xlu0 %v2035, 64
    %v2069 = vpop.permute.xlu0 %2068
    %2072 = vrot.lane.b32.xlu0 %v2066, 64
    %v2073 = vpop.permute.xlu0 %2072
    %vm2075 = vcmask 261120
    %v2076 = vsel %vm2075, %v2069, %v2073
    %v2077 = vpack.c.bf16 %v2076, %v2076
    %v2078 = vlaneseq
    %v2079 = vshrl.u32 %v2078, 7
    %v2080 = vsub.s32 0, %v2079
    %v2081 = vrot.slane %v67, %v2080
    %v2090 = vunpack.c.l.b16 %v54
    %v2091 = vunpack.c.l.b16 %v55
    %v2092 = vunpack.c.l.b16 %v56
    %v2093 = vunpack.c.l.b16 %v57
    %v2094 = vunpack.c.l.b16 %v58
    %v2095 = vunpack.c.l.b16 %v59
    %v2096 = vunpack.c.l.b16 %v60
    %v2097 = vunpack.c.l.b16 %v61
    %v2098 = vpack.c.b16 %v2091, %v2090
    %v2099 = vpack.c.b16 %v2093, %v2092
    %v2100 = vpack.c.b16 %v2095, %v2094
    %v2101 = vpack.c.b16 %v2097, %v2096
    %v2107 = vsel %vm385, %v2077, 0
    %2109 = vmatprep.subr.bf16.mxu0 0
    %2110 = vmatpush1.bf16.msra.mxu0 0
    %2111 = vmatprep.subr.bf16.mxu0 0
    %2112 = vmatpush1.bf16.msra.mxu0 0
    %2113 = vmatprep.subr.bf16.mxu0 0
    %2114 = vmatpush1.bf16.msra.mxu0 0
    %2115 = vmatprep.subr.bf16.mxu0 0
    %2116 = vmatpush1.bf16.msra.mxu0 0
    %2117 = vmatprep.subr.bf16.mxu0 0
    %2118 = vmatpush1.bf16.msra.mxu0 %v2101
    %2119 = vmatprep.subr.bf16.mxu0 0
    %2120 = vmatpush1.bf16.msra.mxu0 %v2100
    %2121 = vmatprep.subr.bf16.mxu0 0
    %2122 = vmatpush1.bf16.msra.mxu0 %v2099
    %2123 = vmatprep.subr.bf16.mxu0 0
    %2124 = vmatpush1.bf16.msra.mxu0 %v2098
    %2125 = vmatprep.subr.bf16.mxu0 0
    %2126 = vmatpush2.bf16.msra.mxu0 0
    %2127 = vmatprep.subr.bf16.mxu0 0
    %2128 = vmatpush2.bf16.msra.mxu0 0
    %2129 = vmatprep.subr.bf16.mxu0 0
    %2130 = vmatpush2.bf16.msra.mxu0 0
    %2131 = vmatprep.subr.bf16.mxu0 0
    %2132 = vmatpush2.bf16.msra.mxu0 0
    %2133 = vmatprep.subr.bf16.mxu0 0
    %2134 = vmatpush2.bf16.msra.mxu0 0
    %2135 = vmatprep.subr.bf16.mxu0 0
    %2136 = vmatpush2.bf16.msra.mxu0 0
    %2137 = vmatprep.subr.bf16.mxu0 0
    %2138 = vmatpush2.bf16.msra.mxu0 0
    %2139 = vmatprep.subr.bf16.mxu0 0
    %2140 = vmatpush2.bf16.msra.mxu0 0
    %2141 = vmatprep.mubr.bf16.mxu0 0
    %2142 = vmatmul.mubr.bf16.gmra.mxu0 %v2107
    %v2143 = vpop.f32.mrf.mxu0
    %v2144 = vadd.f32 %v2081, %v2143
    %v2145 = vpop.f32.mrf.mxu0
    %v2146 = vpop.f32.mrf.mxu0
    %v2147 = vpop.f32.mrf.mxu0
    %2148 = vdwg.mxu0
    %2149 = vst [vmem:[#allocation3] sm:$0xff] %v2144
    // Predicated region
    $region14: #{tagger_forward.1} parent=1 // pred_check
      _
    $region15: #{tagger_forward.1} parent=1 // pred_check_branch
      %2151 = sbr.rel (0) target = $region17
    $region16: #{tagger_forward.1} parent=1 // pred_region
      %s2153 = ssub.s32 128, 128
      %2154 = vsyncadd [#allocation4], %s2153
      %s2156 = sshll.u32 [#allocation3], 4
      %s2157 = int_to_ptr.vmem [resolvable:$true] %s2156
      %2159 = dma.vmem_to_hbm [thread:$0]  %s2157, 128, %s3, [#allocation4]
    $region17: #{tagger_forward.1} parent=1 // pred_fallthru
      _
    // Predicated region
    $region18: #{tagger_forward.1} parent=1 // pred_check
      _
    $region19: #{tagger_forward.1} parent=1 // pred_check_branch
      %2161 = sbr.rel (0) target = $region21
    $region20: #{tagger_forward.1} parent=1 // pred_region
      %2162 = dma.done [#allocation4], 128
    $region21: #{tagger_forward.1} parent=1 // pred_fallthru
      _
    %2163 = vsyncpa [#allocation4], 1

</llo_original>
